<compile_context>
chip_gen: v7x
topology: tpu7x:2x2x1
jax: 0.10.0
libtpu: 0.0.40
codegen_flags: <defaults>
</compile_context>

<pallas_src>
import functools

import jax
import jax.numpy as jnp
from jax.experimental import pallas as pl
from jax.experimental.pallas import tpu as pltpu

LANE = 128  # pad every channel dim to the 128-lane axis

_VMEM = pl.BlockSpec(memory_space=pltpu.MemorySpace.VMEM)


# ----------------------------- Pallas kernel ------------------------------- #

def gin_fused_kernel(adj_ref, x_ref, pool_ref,
                     w1s_ref, b1s_ref, w2s_ref, b2s_ref,
                     wc1_ref, bc1_ref, wc2_ref, bc2_ref,
                     h_ref, reps_ref, logits_ref, *, n_layers: int):
    """Whole GIN forward in one kernel.

    adj_ref  : [N, N]    bf16 adjacency with the (1+eps)*I self-loop folded in.
    x_ref    : [N, P]    bf16 node features, zero-padded to P = 128 lanes.
    pool_ref : [G, N]    bf16 mean-pooling matrix (1/|graph| entries).
    w1s/w2s  : [L, P, P] bf16 stacked per-layer weights (BN folded into w1).
    b1s/b2s  : [L, 1, P] f32  stacked per-layer biases.
    wc1/wc2  : [P, P]    bf16 classifier weights;  bc1/bc2 : [1, P] f32 biases.
    """
    adj = adj_ref[...]
    h_lo = x_ref[...]            # bf16 activations feeding the MXU
    h_hi = None                  # f32 output of the current layer
    for l in range(n_layers):    # static unroll: layer count/dims are compile-time
        # GINConv aggregation: (adj + (1+eps)I) @ h   (self-loop already folded)
        agg = jnp.dot(adj, h_lo, preferred_element_type=jnp.float32)
        # MLP: Linear (with folded eval-mode BN) -> ReLU -> Linear [-> ReLU except last]
        z = jnp.dot(agg.astype(jnp.bfloat16), w1s_ref[l],
                    preferred_element_type=jnp.float32) + b1s_ref[l]
        z = jnp.maximum(z, 0.0)
        z = jnp.dot(z.astype(jnp.bfloat16), w2s_ref[l],
                    preferred_element_type=jnp.float32) + b2s_ref[l]
        if l < n_layers - 1:
            z = jnp.maximum(z, 0.0)
        h_hi = z
        h_lo = z.astype(jnp.bfloat16)
    h_ref[...] = h_hi
    # global_mean_pool as [G, N] @ [N, P]
    reps = jnp.dot(pool_ref[...], h_lo, preferred_element_type=jnp.float32)
    reps_ref[...] = reps
    # classifier: Linear -> ReLU -> Linear
    zc = jnp.dot(reps.astype(jnp.bfloat16), wc1_ref[...],
                 preferred_element_type=jnp.float32) + bc1_ref[...]
    zc = jnp.maximum(zc, 0.0)
    logits_ref[...] = jnp.dot(zc.astype(jnp.bfloat16), wc2_ref[...],
                              preferred_element_type=jnp.float32) + bc2_ref[...]


def gin_forward(adj_lp, x_lp, pool_lp, stacked, cls, *,
                n_layers, embedding_dim, output_dim):
    """Single fused pallas_call for the full forward. Returns (h, reps, logits)."""
    w1s, b1s, w2s, b2s = stacked
    wc1, bc1, wc2, bc2 = cls
    n, p = x_lp.shape
    g = pool_lp.shape[0]
    h_p, reps_p, logits_p = pl.pallas_call(
        functools.partial(gin_fused_kernel, n_layers=n_layers),
        out_shape=(jax.ShapeDtypeStruct((n, p), jnp.float32),
                   jax.ShapeDtypeStruct((g, p), jnp.float32),
                   jax.ShapeDtypeStruct((g, p), jnp.float32)),
        in_specs=[_VMEM] * 11,
        out_specs=(_VMEM, _VMEM, _VMEM),
    )(adj_lp, x_lp, pool_lp, w1s, b1s, w2s, b2s, wc1, bc1, wc2, bc2)
    # strip lane padding on the host
    return (h_p[:, :embedding_dim], reps_p[:, :embedding_dim],
            logits_p[:, :output_dim])


# ------------------------- parameter construction -------------------------- #

def _linear_init(key, d_in, d_out):
    kw, kb = jax.random.split(key)
    scale = 1.0 / jnp.sqrt(jnp.float32(d_in))
    w = jax.random.uniform(kw, (d_in, d_out), jnp.float32, -scale, scale)
    b = jax.random.uniform(kb, (1, d_out), jnp.float32, -scale, scale)
    return w, b


def make_gin_mlp_params(key, d_in, d_hidden, d_out):
    """Params for Sequential(Linear, BatchNorm1d, ReLU, Linear[, ReLU]), eval mode."""
    k1, k2, k3 = jax.random.split(key, 3)
    w1, b1 = _linear_init(k1, d_in, d_hidden)
    gamma = 1.0 + 0.1 * jax.random.normal(k3, (1, d_hidden), jnp.float32)
    beta = 0.1 * jax.random.normal(jax.random.fold_in(k3, 1), (1, d_hidden), jnp.float32)
    run_mean = 0.05 * jax.random.normal(jax.random.fold_in(k3, 2), (1, d_hidden), jnp.float32)
    run_var = jnp.abs(1.0 + 0.1 * jax.random.normal(jax.random.fold_in(k3, 3),
                                                    (1, d_hidden), jnp.float32))
    s = gamma / jnp.sqrt(run_var + 1e-5)     # eval-mode BN folded to scale/shift
    t = beta - run_mean * s
    w2, b2 = _linear_init(k2, d_hidden, d_out)
    return (w1, b1, s, t, w2, b2)


def make_classifier_params(key, d_emb, d_out):
    k1, k2 = jax.random.split(key)
    wc1, bc1 = _linear_init(k1, d_emb, d_emb)
    wc2, bc2 = _linear_init(k2, d_emb, d_out)
    return (wc1, bc1, wc2, bc2)


def _pad2(a, rows, cols):
    out = jnp.zeros((rows, cols), a.dtype)
    return out.at[:a.shape[0], :a.shape[1]].set(a)


def fold_and_pad(layer_params, classifier_params, pad=LANE):
    """Fold BN into the first Linear of each GIN MLP, zero-pad channel dims to
    `pad` lanes, stack per-layer tensors (identical shapes after padding)."""
    w1s, b1s, w2s, b2s = [], [], [], []
    for (w1, b1, s, t, w2, b2) in layer_params:
        w1s.append(_pad2(w1 * s, pad, pad))        # w1' = w1 * s
        b1s.append(_pad2(b1 * s + t, 1, pad))      # b1' = b1 * s + t
        w2s.append(_pad2(w2, pad, pad))
        b2s.append(_pad2(b2, 1, pad))
    stacked = (jnp.stack(w1s), jnp.stack(b1s), jnp.stack(w2s), jnp.stack(b2s))
    wc1, bc1, wc2, bc2 = classifier_params
    cls = (_pad2(wc1, pad, pad), _pad2(bc1, 1, pad),
           _pad2(wc2, pad, pad), _pad2(bc2, 1, pad))
    return stacked, cls


def cast_for_mxu(stacked, cls):
    """Matmul operands (weights) -> bf16; biases stay f32 (f32 epilogue)."""
    w1s, b1s, w2s, b2s = stacked
    wc1, bc1, wc2, bc2 = cls
    return ((w1s.astype(jnp.bfloat16), b1s, w2s.astype(jnp.bfloat16), b2s),
            (wc1.astype(jnp.bfloat16), bc1, wc2.astype(jnp.bfloat16), bc2))


# -------------------------- pure-JAX references ----------------------------- #

def _module_reference(x, adj, pool_mat, layer_params, classifier_params, n_layers):
    """f32 reference of the original module math (unfolded BN, explicit self-loop)."""
    def dot(a, b):
        return jnp.dot(a, b, preferred_element_type=jnp.float32,
                       precision=jax.lax.Precision.HIGHEST)

    def layer(h, p, final_relu):
        w1, b1, s, t, w2, b2 = p
        agg = dot(adj, h) + h                               # GINConv, eps = 0
        z = jnp.maximum((dot(agg, w1) + b1) * s + t, 0.0)   # Linear -> BN -> ReLU
        z = dot(z, w2) + b2                                 # Linear
        return jnp.maximum(z, 0.0) if final_relu else z

    h = layer(x, layer_params[0], n_layers > 1)
    for p in layer_params[1:-1]:
        h = layer(h, p, True)
    if n_layers > 1:
        h = layer(h, layer_params[-1], False)
    reps = dot(pool_mat, h)
    wc1, bc1, wc2, bc2 = classifier_params
    logits = dot(jnp.maximum(dot(reps, wc1) + bc1, 0.0), wc2) + bc2
    return h, reps, logits


def _folded_reference(adj_pi, x_in, pool_in, stacked, cls, n_layers, low_precision):
    """Mirrors the kernel math (folded/padded params; optionally bf16 MXU operands
    with f32 accumulation, exactly like the kernel)."""
    if low_precision:
        def dot(a, b):
            return jnp.dot(a.astype(jnp.bfloat16), b.astype(jnp.bfloat16),
                           preferred_element_type=jnp.float32)
    else:
        def dot(a, b):
            return jnp.dot(a, b, preferred_element_type=jnp.float32,
                           precision=jax.lax.Precision.HIGHEST)

    w1s, b1s, w2s, b2s = stacked
    wc1, bc1, wc2, bc2 = cls
    h = x_in
    h_out = None
    for l in range(n_layers):
        agg = dot(adj_pi, h)
        z = dot(agg, w1s[l]) + b1s[l]
        z = jnp.maximum(z, 0.0)
        z = dot(z, w2s[l]) + b2s[l]
        if l < n_layers - 1:
            z = jnp.maximum(z, 0.0)
        h_out = z
        h = z
    reps = dot(pool_in, h)
    zc = jnp.maximum(dot(reps, wc1) + bc1, 0.0)
    logits = dot(zc, wc2) + bc2
    return h_out, reps, logits


# --------------------------------- main ------------------------------------ #

if __name__ == "__main__":
    key = jax.random.PRNGKey(0)

    # Small problem sizes implied by the module.
    N_NODES = 16          # total nodes across the batch of graphs
    NUM_FEATURES = 8
    HIDDEN_DIM = 32
    EMBEDDING_DIM = 16
    OUTPUT_DIM = 4
    N_LAYERS = 3
    NUM_GRAPHS = 2
    N_EDGES = 40

    k_x, k_e, k_p = jax.random.split(key, 3)

    # Node features [N, F]
    x = jax.random.normal(k_x, (N_NODES, NUM_FEATURES), jnp.float32)

    # Random edge_index -> dense adjacency with adj[dst, src] = multiplicity
    src = jax.random.randint(jax.random.fold_in(k_e, 0), (N_EDGES,), 0, N_NODES)
    dst = jax.random.randint(jax.random.fold_in(k_e, 1), (N_EDGES,), 0, N_NODES)
    adj = jnp.zeros((N_NODES, N_NODES), jnp.float32).at[dst, src].add(1.0)

    # batch vector -> mean-pooling matrix [G, N] (== global_mean_pool)
    batch = jnp.concatenate([jnp.zeros(N_NODES // 2, jnp.int32),
                             jnp.ones(N_NODES - N_NODES // 2, jnp.int32)])
    onehot = (batch[None, :] == jnp.arange(NUM_GRAPHS)[:, None]).astype(jnp.float32)
    pool_mat = onehot / jnp.maximum(onehot.sum(axis=1, keepdims=True), 1.0)

    # Deterministic parameters matching the module's layer shapes.
    keys = jax.random.split(k_p, N_LAYERS + 1)
    if N_LAYERS == 1:
        layer_params = [make_gin_mlp_params(keys[0], NUM_FEATURES, HIDDEN_DIM,
                                            EMBEDDING_DIM)]
    else:
        layer_params = [make_gin_mlp_params(keys[0], NUM_FEATURES, HIDDEN_DIM,
                                            HIDDEN_DIM)]
        for i in range(N_LAYERS - 2):
            layer_params.append(make_gin_mlp_params(keys[1 + i], HIDDEN_DIM,
                                                    HIDDEN_DIM, HIDDEN_DIM))
        layer_params.append(make_gin_mlp_params(keys[N_LAYERS - 1], HIDDEN_DIM,
                                                HIDDEN_DIM, EMBEDDING_DIM))
    classifier_params = make_classifier_params(keys[N_LAYERS], EMBEDDING_DIM, OUTPUT_DIM)

    # Host-side folds: self-loop into adjacency (eps = 0), BN into w1, pad to 128 lanes.
    adj_plus_i = adj + (1.0 + 0.0) * jnp.eye(N_NODES, dtype=jnp.float32)
    x_pad = _pad2(x, N_NODES, LANE)
    stacked_f32, cls_f32 = fold_and_pad(layer_params, classifier_params, LANE)
    stacked_lp, cls_lp = cast_for_mxu(stacked_f32, cls_f32)

    adj_lp = adj_plus_i.astype(jnp.bfloat16)   # integer multiplicities: exact in bf16
    x_lp = x_pad.astype(jnp.bfloat16)
    pool_lp = pool_mat.astype(jnp.bfloat16)

    # Run the fused Pallas kernel once.
    h, reps, logits = gin_forward(adj_lp, x_lp, pool_lp, stacked_lp, cls_lp,
                                  n_layers=N_LAYERS, embedding_dim=EMBEDDING_DIM,
                                  output_dim=OUTPUT_DIM)
    jax.block_until_ready((h, reps, logits))

    assert h.shape == (N_NODES, EMBEDDING_DIM)
    assert reps.shape == (NUM_GRAPHS, EMBEDDING_DIM)
    assert logits.shape == (NUM_GRAPHS, OUTPUT_DIM)

    # Check 1 (pure f32): the host-side folds (adj+I, BN->w1, zero padding) are
    # exact transformations of the original module math.
    h_m, reps_m, logits_m = _module_reference(x, adj, pool_mat, layer_params,
                                              classifier_params, N_LAYERS)
    h_f, reps_f, logits_f = _folded_reference(adj_plus_i, x_pad, pool_mat,
                                              stacked_f32, cls_f32, N_LAYERS,
                                              low_precision=False)
    assert jnp.allclose(h_f[:, :EMBEDDING_DIM], h_m, atol=1e-4, rtol=1e-4)
    assert jnp.allclose(reps_f[:, :EMBEDDING_DIM], reps_m, atol=1e-4, rtol=1e-4)
    assert jnp.allclose(logits_f[:, :OUTPUT_DIM], logits_m, atol=1e-4, rtol=1e-4)

    # Check 2: the Pallas kernel matches a pure-JAX reference doing the same
    # bf16-operand / f32-accumulation math on the same folded/padded arrays.
    h_r, reps_r, logits_r = _folded_reference(adj_lp, x_lp, pool_lp,
                                              stacked_lp, cls_lp, N_LAYERS,
                                              low_precision=True)
    assert jnp.allclose(h, h_r[:, :EMBEDDING_DIM], atol=1e-2, rtol=1e-2)
    assert jnp.allclose(reps, reps_r[:, :EMBEDDING_DIM], atol=1e-2, rtol=1e-2)
    assert jnp.allclose(logits, logits_r[:, :OUTPUT_DIM], atol=1e-2, rtol=1e-2)

    print("KERNEL_OK")
</pallas_src>

<mosaic_0001>
module attributes {stable_mosaic.version = 11 : i64} {
  func.func @gin_fused_kernel(%arg0: memref<16x16xbf16, #tpu.memory_space<vmem>>, %arg1: memref<16x128xbf16, #tpu.memory_space<vmem>>, %arg2: memref<2x16xbf16, #tpu.memory_space<vmem>>, %arg3: memref<3x128x128xbf16, #tpu.memory_space<vmem>>, %arg4: memref<3x1x128xf32, #tpu.memory_space<vmem>>, %arg5: memref<3x128x128xbf16, #tpu.memory_space<vmem>>, %arg6: memref<3x1x128xf32, #tpu.memory_space<vmem>>, %arg7: memref<128x128xbf16, #tpu.memory_space<vmem>>, %arg8: memref<1x128xf32, #tpu.memory_space<vmem>>, %arg9: memref<128x128xbf16, #tpu.memory_space<vmem>>, %arg10: memref<1x128xf32, #tpu.memory_space<vmem>>, %arg11: memref<16x128xf32, #tpu.memory_space<vmem>>, %arg12: memref<2x128xf32, #tpu.memory_space<vmem>>, %arg13: memref<2x128xf32, #tpu.memory_space<vmem>>) attributes {dimension_semantics = [], scalar_prefetch = 0 : i64, scratch_operands = 0 : i64, tpu.core_type = #tpu.core_type<tc>} {
    %c0 = arith.constant 0 : index
    %c0_0 = arith.constant 0 : index
    %0 = vector.load %arg0[%c0, %c0_0] : memref<16x16xbf16, #tpu.memory_space<vmem>>, vector<16x16xbf16>
    %c0_1 = arith.constant 0 : index
    %c0_2 = arith.constant 0 : index
    %1 = vector.load %arg1[%c0_1, %c0_2] : memref<16x128xbf16, #tpu.memory_space<vmem>>, vector<16x128xbf16>
    %cst = arith.constant dense<0.000000e+00> : vector<16x128xf32>
    %2 = tpu.matmul %0, %1, %cst {dimension_numbers = #tpu.dot_dimension_numbers<[1], [0], [0], [1], [0, 0, 1, 1], [], []>} : vector<16x16xbf16>, vector<16x128xbf16>, vector<16x128xf32> -> vector<16x128xf32>
    %3 = arith.truncf %2 : vector<16x128xf32> to vector<16x128xbf16>
    %c0_3 = arith.constant 0 : index
    %c0_4 = arith.constant 0 : index
    %c0_5 = arith.constant 0 : index
    %4 = vector.load %arg3[%c0_3, %c0_4, %c0_5] : memref<3x128x128xbf16, #tpu.memory_space<vmem>>, vector<1x128x128xbf16>
    %5 = vector.shape_cast %4 : vector<1x128x128xbf16> to vector<128x128xbf16>
    %cst_6 = arith.constant dense<0.000000e+00> : vector<16x128xf32>
    %6 = tpu.matmul %3, %5, %cst_6 {dimension_numbers = #tpu.dot_dimension_numbers<[1], [0], [0], [1], [0, 0, 1, 1], [], []>} : vector<16x128xbf16>, vector<128x128xbf16>, vector<16x128xf32> -> vector<16x128xf32>
    %c0_7 = arith.constant 0 : index
    %c0_8 = arith.constant 0 : index
    %c0_9 = arith.constant 0 : index
    %7 = vector.load %arg4[%c0_7, %c0_8, %c0_9] : memref<3x1x128xf32, #tpu.memory_space<vmem>>, vector<1x1x128xf32>
    %8 = vector.shape_cast %7 : vector<1x1x128xf32> to vector<1x128xf32>
    %9 = vector.broadcast %8 : vector<1x128xf32> to vector<16x128xf32>
    %10 = arith.addf %6, %9 : vector<16x128xf32>
    %cst_10 = arith.constant 0.000000e+00 : f32
    %11 = vector.broadcast %cst_10 : f32 to vector<16x128xf32>
    %12 = arith.maximumf %10, %11 : vector<16x128xf32>
    %13 = arith.truncf %12 : vector<16x128xf32> to vector<16x128xbf16>
    %c0_11 = arith.constant 0 : index
    %c0_12 = arith.constant 0 : index
    %c0_13 = arith.constant 0 : index
    %14 = vector.load %arg5[%c0_11, %c0_12, %c0_13] : memref<3x128x128xbf16, #tpu.memory_space<vmem>>, vector<1x128x128xbf16>
    %15 = vector.shape_cast %14 : vector<1x128x128xbf16> to vector<128x128xbf16>
    %cst_14 = arith.constant dense<0.000000e+00> : vector<16x128xf32>
    %16 = tpu.matmul %13, %15, %cst_14 {dimension_numbers = #tpu.dot_dimension_numbers<[1], [0], [0], [1], [0, 0, 1, 1], [], []>} : vector<16x128xbf16>, vector<128x128xbf16>, vector<16x128xf32> -> vector<16x128xf32>
    %c0_15 = arith.constant 0 : index
    %c0_16 = arith.constant 0 : index
    %c0_17 = arith.constant 0 : index
    %17 = vector.load %arg6[%c0_15, %c0_16, %c0_17] : memref<3x1x128xf32, #tpu.memory_space<vmem>>, vector<1x1x128xf32>
    %18 = vector.shape_cast %17 : vector<1x1x128xf32> to vector<1x128xf32>
    %19 = vector.broadcast %18 : vector<1x128xf32> to vector<16x128xf32>
    %20 = arith.addf %16, %19 : vector<16x128xf32>
    %cst_18 = arith.constant 0.000000e+00 : f32
    %21 = vector.broadcast %cst_18 : f32 to vector<16x128xf32>
    %22 = arith.maximumf %20, %21 : vector<16x128xf32>
    %23 = arith.truncf %22 : vector<16x128xf32> to vector<16x128xbf16>
    %cst_19 = arith.constant dense<0.000000e+00> : vector<16x128xf32>
    %24 = tpu.matmul %0, %23, %cst_19 {dimension_numbers = #tpu.dot_dimension_numbers<[1], [0], [0], [1], [0, 0, 1, 1], [], []>} : vector<16x16xbf16>, vector<16x128xbf16>, vector<16x128xf32> -> vector<16x128xf32>
    %25 = arith.truncf %24 : vector<16x128xf32> to vector<16x128xbf16>
    %c1 = arith.constant 1 : index
    %c0_20 = arith.constant 0 : index
    %c0_21 = arith.constant 0 : index
    %26 = vector.load %arg3[%c1, %c0_20, %c0_21] : memref<3x128x128xbf16, #tpu.memory_space<vmem>>, vector<1x128x128xbf16>
    %27 = vector.shape_cast %26 : vector<1x128x128xbf16> to vector<128x128xbf16>
    %cst_22 = arith.constant dense<0.000000e+00> : vector<16x128xf32>
    %28 = tpu.matmul %25, %27, %cst_22 {dimension_numbers = #tpu.dot_dimension_numbers<[1], [0], [0], [1], [0, 0, 1, 1], [], []>} : vector<16x128xbf16>, vector<128x128xbf16>, vector<16x128xf32> -> vector<16x128xf32>
    %c1_23 = arith.constant 1 : index
    %c0_24 = arith.constant 0 : index
    %c0_25 = arith.constant 0 : index
    %29 = vector.load %arg4[%c1_23, %c0_24, %c0_25] : memref<3x1x128xf32, #tpu.memory_space<vmem>>, vector<1x1x128xf32>
    %30 = vector.shape_cast %29 : vector<1x1x128xf32> to vector<1x128xf32>
    %31 = vector.broadcast %30 : vector<1x128xf32> to vector<16x128xf32>
    %32 = arith.addf %28, %31 : vector<16x128xf32>
    %cst_26 = arith.constant 0.000000e+00 : f32
    %33 = vector.broadcast %cst_26 : f32 to vector<16x128xf32>
    %34 = arith.maximumf %32, %33 : vector<16x128xf32>
    %35 = arith.truncf %34 : vector<16x128xf32> to vector<16x128xbf16>
    %c1_27 = arith.constant 1 : index
    %c0_28 = arith.constant 0 : index
    %c0_29 = arith.constant 0 : index
    %36 = vector.load %arg5[%c1_27, %c0_28, %c0_29] : memref<3x128x128xbf16, #tpu.memory_space<vmem>>, vector<1x128x128xbf16>
    %37 = vector.shape_cast %36 : vector<1x128x128xbf16> to vector<128x128xbf16>
    %cst_30 = arith.constant dense<0.000000e+00> : vector<16x128xf32>
    %38 = tpu.matmul %35, %37, %cst_30 {dimension_numbers = #tpu.dot_dimension_numbers<[1], [0], [0], [1], [0, 0, 1, 1], [], []>} : vector<16x128xbf16>, vector<128x128xbf16>, vector<16x128xf32> -> vector<16x128xf32>
    %c1_31 = arith.constant 1 : index
    %c0_32 = arith.constant 0 : index
    %c0_33 = arith.constant 0 : index
    %39 = vector.load %arg6[%c1_31, %c0_32, %c0_33] : memref<3x1x128xf32, #tpu.memory_space<vmem>>, vector<1x1x128xf32>
    %40 = vector.shape_cast %39 : vector<1x1x128xf32> to vector<1x128xf32>
    %41 = vector.broadcast %40 : vector<1x128xf32> to vector<16x128xf32>
    %42 = arith.addf %38, %41 : vector<16x128xf32>
    %cst_34 = arith.constant 0.000000e+00 : f32
    %43 = vector.broadcast %cst_34 : f32 to vector<16x128xf32>
    %44 = arith.maximumf %42, %43 : vector<16x128xf32>
    %45 = arith.truncf %44 : vector<16x128xf32> to vector<16x128xbf16>
    %cst_35 = arith.constant dense<0.000000e+00> : vector<16x128xf32>
    %46 = tpu.matmul %0, %45, %cst_35 {dimension_numbers = #tpu.dot_dimension_numbers<[1], [0], [0], [1], [0, 0, 1, 1], [], []>} : vector<16x16xbf16>, vector<16x128xbf16>, vector<16x128xf32> -> vector<16x128xf32>
    %47 = arith.truncf %46 : vector<16x128xf32> to vector<16x128xbf16>
    %c2 = arith.constant 2 : index
    %c0_36 = arith.constant 0 : index
    %c0_37 = arith.constant 0 : index
    %48 = vector.load %arg3[%c2, %c0_36, %c0_37] : memref<3x128x128xbf16, #tpu.memory_space<vmem>>, vector<1x128x128xbf16>
    %49 = vector.shape_cast %48 : vector<1x128x128xbf16> to vector<128x128xbf16>
    %cst_38 = arith.constant dense<0.000000e+00> : vector<16x128xf32>
    %50 = tpu.matmul %47, %49, %cst_38 {dimension_numbers = #tpu.dot_dimension_numbers<[1], [0], [0], [1], [0, 0, 1, 1], [], []>} : vector<16x128xbf16>, vector<128x128xbf16>, vector<16x128xf32> -> vector<16x128xf32>
    %c2_39 = arith.constant 2 : index
    %c0_40 = arith.constant 0 : index
    %c0_41 = arith.constant 0 : index
    %51 = vector.load %arg4[%c2_39, %c0_40, %c0_41] : memref<3x1x128xf32, #tpu.memory_space<vmem>>, vector<1x1x128xf32>
    %52 = vector.shape_cast %51 : vector<1x1x128xf32> to vector<1x128xf32>
    %53 = vector.broadcast %52 : vector<1x128xf32> to vector<16x128xf32>
    %54 = arith.addf %50, %53 : vector<16x128xf32>
    %cst_42 = arith.constant 0.000000e+00 : f32
    %55 = vector.broadcast %cst_42 : f32 to vector<16x128xf32>
    %56 = arith.maximumf %54, %55 : vector<16x128xf32>
    %57 = arith.truncf %56 : vector<16x128xf32> to vector<16x128xbf16>
    %c2_43 = arith.constant 2 : index
    %c0_44 = arith.constant 0 : index
    %c0_45 = arith.constant 0 : index
    %58 = vector.load %arg5[%c2_43, %c0_44, %c0_45] : memref<3x128x128xbf16, #tpu.memory_space<vmem>>, vector<1x128x128xbf16>
    %59 = vector.shape_cast %58 : vector<1x128x128xbf16> to vector<128x128xbf16>
    %cst_46 = arith.constant dense<0.000000e+00> : vector<16x128xf32>
    %60 = tpu.matmul %57, %59, %cst_46 {dimension_numbers = #tpu.dot_dimension_numbers<[1], [0], [0], [1], [0, 0, 1, 1], [], []>} : vector<16x128xbf16>, vector<128x128xbf16>, vector<16x128xf32> -> vector<16x128xf32>
    %c2_47 = arith.constant 2 : index
    %c0_48 = arith.constant 0 : index
    %c0_49 = arith.constant 0 : index
    %61 = vector.load %arg6[%c2_47, %c0_48, %c0_49] : memref<3x1x128xf32, #tpu.memory_space<vmem>>, vector<1x1x128xf32>
    %62 = vector.shape_cast %61 : vector<1x1x128xf32> to vector<1x128xf32>
    %63 = vector.broadcast %62 : vector<1x128xf32> to vector<16x128xf32>
    %64 = arith.addf %60, %63 : vector<16x128xf32>
    %65 = arith.truncf %64 : vector<16x128xf32> to vector<16x128xbf16>
    %c0_50 = arith.constant 0 : index
    %c0_51 = arith.constant 0 : index
    %66 = vector.load %arg11[%c0_50, %c0_51] : memref<16x128xf32, #tpu.memory_space<vmem>>, vector<16x128xf32>
    tpu.vector_store %arg11[%c0_50, %c0_51], %64 {strides = array<i32>} : memref<16x128xf32, #tpu.memory_space<vmem>>, vector<16x128xf32>,
    %c0_52 = arith.constant 0 : index
    %c0_53 = arith.constant 0 : index
    %67 = vector.load %arg2[%c0_52, %c0_53] : memref<2x16xbf16, #tpu.memory_space<vmem>>, vector<2x16xbf16>
    %cst_54 = arith.constant dense<0.000000e+00> : vector<2x128xf32>
    %68 = tpu.matmul %67, %65, %cst_54 {dimension_numbers = #tpu.dot_dimension_numbers<[1], [0], [0], [1], [0, 0, 1, 1], [], []>} : vector<2x16xbf16>, vector<16x128xbf16>, vector<2x128xf32> -> vector<2x128xf32>
    %c0_55 = arith.constant 0 : index
    %c0_56 = arith.constant 0 : index
    %69 = vector.load %arg12[%c0_55, %c0_56] : memref<2x128xf32, #tpu.memory_space<vmem>>, vector<2x128xf32>
    tpu.vector_store %arg12[%c0_55, %c0_56], %68 {strides = array<i32>} : memref<2x128xf32, #tpu.memory_space<vmem>>, vector<2x128xf32>,
    %70 = arith.truncf %68 : vector<2x128xf32> to vector<2x128xbf16>
    %c0_57 = arith.constant 0 : index
    %c0_58 = arith.constant 0 : index
    %71 = vector.load %arg7[%c0_57, %c0_58] : memref<128x128xbf16, #tpu.memory_space<vmem>>, vector<128x128xbf16>
    %cst_59 = arith.constant dense<0.000000e+00> : vector<2x128xf32>
    %72 = tpu.matmul %70, %71, %cst_59 {dimension_numbers = #tpu.dot_dimension_numbers<[1], [0], [0], [1], [0, 0, 1, 1], [], []>} : vector<2x128xbf16>, vector<128x128xbf16>, vector<2x128xf32> -> vector<2x128xf32>
    %c0_60 = arith.constant 0 : index
    %c0_61 = arith.constant 0 : index
    %73 = vector.load %arg8[%c0_60, %c0_61] : memref<1x128xf32, #tpu.memory_space<vmem>>, vector<1x128xf32>
    %74 = vector.broadcast %73 : vector<1x128xf32> to vector<2x128xf32>
    %75 = arith.addf %72, %74 : vector<2x128xf32>
    %cst_62 = arith.constant 0.000000e+00 : f32
    %76 = vector.broadcast %cst_62 : f32 to vector<2x128xf32>
    %77 = arith.maximumf %75, %76 : vector<2x128xf32>
    %78 = arith.truncf %77 : vector<2x128xf32> to vector<2x128xbf16>
    %c0_63 = arith.constant 0 : index
    %c0_64 = arith.constant 0 : index
    %79 = vector.load %arg9[%c0_63, %c0_64] : memref<128x128xbf16, #tpu.memory_space<vmem>>, vector<128x128xbf16>
    %cst_65 = arith.constant dense<0.000000e+00> : vector<2x128xf32>
    %80 = tpu.matmul %78, %79, %cst_65 {dimension_numbers = #tpu.dot_dimension_numbers<[1], [0], [0], [1], [0, 0, 1, 1], [], []>} : vector<2x128xbf16>, vector<128x128xbf16>, vector<2x128xf32> -> vector<2x128xf32>
    %c0_66 = arith.constant 0 : index
    %c0_67 = arith.constant 0 : index
    %81 = vector.load %arg10[%c0_66, %c0_67] : memref<1x128xf32, #tpu.memory_space<vmem>>, vector<1x128xf32>
    %82 = vector.broadcast %81 : vector<1x128xf32> to vector<2x128xf32>
    %83 = arith.addf %80, %82 : vector<2x128xf32>
    %c0_68 = arith.constant 0 : index
    %c0_69 = arith.constant 0 : index
    %84 = vector.load %arg13[%c0_68, %c0_69] : memref<2x128xf32, #tpu.memory_space<vmem>>, vector<2x128xf32>
    tpu.vector_store %arg13[%c0_68, %c0_69], %83 {strides = array<i32>} : memref<2x128xf32, #tpu.memory_space<vmem>>, vector<2x128xf32>,
    return
  }
}

</mosaic_0001>

<llo_original>
// kernel: tpu_custom_call.1
$region0: #{tpu_custom_call.1}
  #allocation0 [shape = 'u32[]', space=smem, size = 0x4, offset = 0x4, fixed_abs, tag = 'smem constant byte address 0x4 - core index']
  #allocation1 [shape = 'u32[144,128]{1,0:T(1,128)}', space=vmem, size = 0x12000, scoped, tag = 'internal scratch']
  %s0 = inlined_call_operand.hbm [shape: bf16[16,16], index: 0, kind: input, shape index: {}]
  %s1 = inlined_call_operand.hbm [shape: bf16[16,128], index: 1, kind: input, shape index: {}]
  %s2 = inlined_call_operand.vmem [shape: bf16[2,16], index: 2, kind: input, shape index: {}]
  %s3 = inlined_call_operand.hbm [shape: bf16[3,128,128], index: 3, kind: input, shape index: {}]
  %s4 = inlined_call_operand.vmem [shape: f32[3,1,128], index: 4, kind: input, shape index: {}]
  %s5 = inlined_call_operand.hbm [shape: bf16[3,128,128], index: 5, kind: input, shape index: {}]
  %s6 = inlined_call_operand.vmem [shape: f32[3,1,128], index: 6, kind: input, shape index: {}]
  %s7 = inlined_call_operand.hbm [shape: bf16[128,128], index: 7, kind: input, shape index: {}]
  %s8 = inlined_call_operand.vmem [shape: f32[1,128], index: 8, kind: input, shape index: {}]
  %s9 = inlined_call_operand.hbm [shape: bf16[128,128], index: 9, kind: input, shape index: {}]
  %s10 = inlined_call_operand.vmem [shape: f32[1,128], index: 10, kind: input, shape index: {}]
  %s11 = inlined_call_operand.hbm [shape: f32[16,128], index: 11, kind: output, shape index: {0}]
  %s12 = inlined_call_operand.hbm [shape: f32[2,128], index: 12, kind: output, shape index: {1}]
  %s13 = inlined_call_operand.hbm [shape: f32[2,128], index: 13, kind: output, shape index: {2}]
  %14 = xla_tuple %s11, %s12, %s13
  %s15 = sld [smem:[#allocation0]]
  $region94: #{tpu_custom_call.1} parent=0
    _
  %s17 = ssub.s32 1, %s15
  %s18 = scalar_select 0, %s17, %s15
  $region1: #{tpu_custom_call.1} parent=0
    #allocation2 [shape = 'u8[4096]{0}', space=vmem, size = 0x1000, scoped, tag = 'input window, operand 0, single buffered']
    #allocation3 [shape = 's32[1]{0}', space=sflag, size = 0x4, scoped, tag = 'scoped memory for tpu_custom_call.1']
    #allocation4 [shape = 's32[1]{0}', space=sflag, size = 0x4, scoped, tag = 'scoped memory for tpu_custom_call.1']
    #allocation5 [shape = 'u8[4096]{0}', space=vmem, size = 0x1000, scoped, tag = 'input window, operand 1, single buffered']
    #allocation6 [shape = 's32[1]{0}', space=sflag, size = 0x4, scoped, tag = 'scoped memory for tpu_custom_call.1']
    #allocation7 [shape = 'u8[98304]{0}', space=vmem, size = 0x18000, scoped, tag = 'input window, operand 3, single buffered']
    #allocation8 [shape = 'u8[98304]{0}', space=vmem, size = 0x18000, scoped, tag = 'input window, operand 5, single buffered']
    #allocation9 [shape = 's32[1]{0}', space=sflag, size = 0x4, scoped, tag = 'scoped memory for tpu_custom_call.1']
    #allocation10 [shape = 'u8[32768]{0}', space=vmem, size = 0x8000, scoped, tag = 'input window, operand 7, single buffered']
    #allocation11 [shape = 'u8[32768]{0}', space=vmem, size = 0x8000, scoped, tag = 'input window, operand 9, single buffered']
    #allocation12 [shape = 's32[1]{0}', space=sflag, size = 0x4, scoped, tag = 'scoped memory for tpu_custom_call.1']
    #allocation13 [shape = 'u8[8192]{0}', space=vmem, size = 0x2000, scoped, tag = 'output window, operand 0, single buffered']
    #allocation14 [shape = 'u8[1024]{0}', space=vmem, size = 0x400, scoped, tag = 'output window, operand 1, single buffered']
    #allocation15 [shape = 's32[1]{0}', space=sflag, size = 0x4, scoped, tag = 'scoped memory for tpu_custom_call.1']
    #allocation16 [shape = 'u8[1024]{0}', space=vmem, size = 0x400, scoped, tag = 'output window, operand 2, single buffered']
    %19 = vsyncpa [#allocation3], 0
    %20 = vsyncpa [#allocation6], 0
    %21 = vsyncpa [#allocation9], 0
    %22 = vsyncpa [#allocation12], 0
    %23 = vsyncpa [#allocation4], 0
    %24 = vsyncpa [#allocation15], 0
    // Predicated region
    $region2: #{tpu_custom_call.1} parent=1 // pred_check
      _
    $region3: #{tpu_custom_call.1} parent=1 // pred_check_branch
      %26 = sbr.rel (0) target = $region5
    $region4: #{tpu_custom_call.1} parent=1 // pred_region
      %s28 = ssub.s32 128, 128
      %29 = vsyncadd [#allocation3], %s28
      %s30 = sshll.u32 [#allocation2], 4
      %s31 = int_to_ptr.vmem [resolvable:$true] %s30
      %36 = dma.hbm_to_vmem [thread:$0]  %s0, 128, %s31, [#allocation3], 64, 64, 4
    $region5: #{tpu_custom_call.1} parent=1 // pred_fallthru
      _
    // Predicated region
    $region6: #{tpu_custom_call.1} parent=1 // pred_check
      _
    $region7: #{tpu_custom_call.1} parent=1 // pred_check_branch
      %38 = sbr.rel (0) target = $region9
    $region8: #{tpu_custom_call.1} parent=1 // pred_region
      %s40 = ssub.s32 128, 128
      %41 = vsyncadd [#allocation6], %s40
      %s42 = sshll.u32 [#allocation5], 4
      %s43 = int_to_ptr.vmem [resolvable:$true] %s42
      %48 = dma.hbm_to_vmem [thread:$0]  %s1, 128, %s43, [#allocation6], 64, 64, 4
    $region9: #{tpu_custom_call.1} parent=1 // pred_fallthru
      _
    // Predicated region
    $region10: #{tpu_custom_call.1} parent=1 // pred_check
      _
    $region11: #{tpu_custom_call.1} parent=1 // pred_check_branch
      %50 = sbr.rel (0) target = $region13
    $region12: #{tpu_custom_call.1} parent=1 // pred_region
      _
    $region13: #{tpu_custom_call.1} parent=1 // pred_fallthru
      _
    // Predicated region
    $region14: #{tpu_custom_call.1} parent=1 // pred_check
      _
    $region15: #{tpu_custom_call.1} parent=1 // pred_check_branch
      %52 = sbr.rel (0) target = $region17
    $region16: #{tpu_custom_call.1} parent=1 // pred_region
      %s54 = ssub.s32 3072, 3072
      %55 = vsyncadd [#allocation6], %s54
      %s56 = sshll.u32 [#allocation7], 4
      %s57 = int_to_ptr.vmem [resolvable:$true] %s56
      %62 = dma.hbm_to_vmem [thread:$0]  %s3, 3072, %s57, [#allocation6], 64, 64, 4
    $region17: #{tpu_custom_call.1} parent=1 // pred_fallthru
      _
    // Predicated region
    $region18: #{tpu_custom_call.1} parent=1 // pred_check
      _
    $region19: #{tpu_custom_call.1} parent=1 // pred_check_branch
      %64 = sbr.rel (0) target = $region21
    $region20: #{tpu_custom_call.1} parent=1 // pred_region
      _
    $region21: #{tpu_custom_call.1} parent=1 // pred_fallthru
      _
    // Predicated region
    $region22: #{tpu_custom_call.1} parent=1 // pred_check
      _
    $region23: #{tpu_custom_call.1} parent=1 // pred_check_branch
      %66 = sbr.rel (0) target = $region25
    $region24: #{tpu_custom_call.1} parent=1 // pred_region
      %s68 = ssub.s32 3072, 3072
      %69 = vsyncadd [#allocation9], %s68
      %s70 = sshll.u32 [#allocation8], 4
      %s71 = int_to_ptr.vmem [resolvable:$true] %s70
      %76 = dma.hbm_to_vmem [thread:$0]  %s5, 3072, %s71, [#allocation9], 64, 64, 4
    $region25: #{tpu_custom_call.1} parent=1 // pred_fallthru
      _
    // Predicated region
    $region26: #{tpu_custom_call.1} parent=1 // pred_check
      _
    $region27: #{tpu_custom_call.1} parent=1 // pred_check_branch
      %78 = sbr.rel (0) target = $region29
    $region28: #{tpu_custom_call.1} parent=1 // pred_region
      _
    $region29: #{tpu_custom_call.1} parent=1 // pred_fallthru
      _
    // Predicated region
    $region30: #{tpu_custom_call.1} parent=1 // pred_check
      _
    $region31: #{tpu_custom_call.1} parent=1 // pred_check_branch
      %80 = sbr.rel (0) target = $region33
    $region32: #{tpu_custom_call.1} parent=1 // pred_region
      %s82 = ssub.s32 1024, 1024
      %83 = vsyncadd [#allocation9], %s82
      %s84 = sshll.u32 [#allocation10], 4
      %s85 = int_to_ptr.vmem [resolvable:$true] %s84
      %90 = dma.hbm_to_vmem [thread:$0]  %s7, 1024, %s85, [#allocation9], 64, 64, 4
    $region33: #{tpu_custom_call.1} parent=1 // pred_fallthru
      _
    // Predicated region
    $region34: #{tpu_custom_call.1} parent=1 // pred_check
      _
    $region35: #{tpu_custom_call.1} parent=1 // pred_check_branch
      %92 = sbr.rel (0) target = $region37
    $region36: #{tpu_custom_call.1} parent=1 // pred_region
      _
    $region37: #{tpu_custom_call.1} parent=1 // pred_fallthru
      _
    // Predicated region
    $region38: #{tpu_custom_call.1} parent=1 // pred_check
      _
    $region39: #{tpu_custom_call.1} parent=1 // pred_check_branch
      %94 = sbr.rel (0) target = $region41
    $region40: #{tpu_custom_call.1} parent=1 // pred_region
      %s96 = ssub.s32 1024, 1024
      %97 = vsyncadd [#allocation12], %s96
      %s98 = sshll.u32 [#allocation11], 4
      %s99 = int_to_ptr.vmem [resolvable:$true] %s98
      %104 = dma.hbm_to_vmem [thread:$0]  %s9, 1024, %s99, [#allocation12], 64, 64, 4
    $region41: #{tpu_custom_call.1} parent=1 // pred_fallthru
      _
    // Predicated region
    $region42: #{tpu_custom_call.1} parent=1 // pred_check
      _
    $region43: #{tpu_custom_call.1} parent=1 // pred_check_branch
      %106 = sbr.rel (0) target = $region45
    $region44: #{tpu_custom_call.1} parent=1 // pred_region
      _
    $region45: #{tpu_custom_call.1} parent=1 // pred_fallthru
      _
    // Predicated region
    $region46: #{tpu_custom_call.1} parent=1 // pred_check
      _
    $region47: #{tpu_custom_call.1} parent=1 // pred_check_branch
      %108 = sbr.rel (0) target = $region49
    $region48: #{tpu_custom_call.1} parent=1 // pred_region
      %109 = dma.done [#allocation3], 128
    $region49: #{tpu_custom_call.1} parent=1 // pred_fallthru
      _
    // Predicated region
    $region50: #{tpu_custom_call.1} parent=1 // pred_check
      _
    $region51: #{tpu_custom_call.1} parent=1 // pred_check_branch
      %111 = sbr.rel (0) target = $region53
    $region52: #{tpu_custom_call.1} parent=1 // pred_region
      %112 = dma.done [#allocation6], 128
    $region53: #{tpu_custom_call.1} parent=1 // pred_fallthru
      _
    // Predicated region
    $region54: #{tpu_custom_call.1} parent=1 // pred_check
      _
    $region55: #{tpu_custom_call.1} parent=1 // pred_check_branch
      %114 = sbr.rel (0) target = $region57
    $region56: #{tpu_custom_call.1} parent=1 // pred_region
      %115 = dma.done [#allocation6], 3072
    $region57: #{tpu_custom_call.1} parent=1 // pred_fallthru
      _
    // Predicated region
    $region58: #{tpu_custom_call.1} parent=1 // pred_check
      _
    $region59: #{tpu_custom_call.1} parent=1 // pred_check_branch
      %117 = sbr.rel (0) target = $region61
    $region60: #{tpu_custom_call.1} parent=1 // pred_region
      %118 = dma.done [#allocation9], 3072
    $region61: #{tpu_custom_call.1} parent=1 // pred_fallthru
      _
    // Predicated region
    $region62: #{tpu_custom_call.1} parent=1 // pred_check
      _
    $region63: #{tpu_custom_call.1} parent=1 // pred_check_branch
      %120 = sbr.rel (0) target = $region65
    $region64: #{tpu_custom_call.1} parent=1 // pred_region
      %121 = dma.done [#allocation9], 1024
    $region65: #{tpu_custom_call.1} parent=1 // pred_fallthru
      _
    // Predicated region
    $region66: #{tpu_custom_call.1} parent=1 // pred_check
      _
    $region67: #{tpu_custom_call.1} parent=1 // pred_check_branch
      %123 = sbr.rel (0) target = $region69
    $region68: #{tpu_custom_call.1} parent=1 // pred_region
      %124 = dma.done [#allocation12], 1024
    $region69: #{tpu_custom_call.1} parent=1 // pred_fallthru
      _
    %v126 = vld [vmem:[#allocation2] sm:$0xf]
    %v127 = vld [vmem:[#allocation2 + $0x4] sm:$0xf]
    %v128 = vld [vmem:[#allocation5] sm:$0xf]
    %v129 = vld [vmem:[#allocation5 + $0x4] sm:$0xf]
    %v132 = vunpack.c.l.b16 %v126
    %v133 = vunpack.c.l.b16 %v127
    %v134 = vpack.c.b16 %v133, %v132
    %v137 = vunpack.c.l.b16 %v128
    %v138 = vunpack.c.l.b16 %v129
    %v139 = vpack.c.b16 %v138, %v137
    %vm141 = vcmask 130048
    %v143 = vsel %vm141, %v134, 0
    %145 = vmatprep.subr.bf16.mxu0 0
    %146 = vmatpush1.bf16.msra.mxu0 %v139
    %147 = vmatprep.subr.bf16.mxu0 0
    %148 = vmatpush1.bf16.msra.mxu0 0
    %149 = vmatprep.subr.bf16.mxu0 0
    %150 = vmatpush1.bf16.msra.mxu0 0
    %151 = vmatprep.subr.bf16.mxu0 0
    %152 = vmatpush1.bf16.msra.mxu0 0
    %153 = vmatprep.subr.bf16.mxu0 0
    %154 = vmatpush1.bf16.msra.mxu0 0
    %155 = vmatprep.subr.bf16.mxu0 0
    %156 = vmatpush1.bf16.msra.mxu0 0
    %157 = vmatprep.subr.bf16.mxu0 0
    %158 = vmatpush1.bf16.msra.mxu0 0
    %159 = vmatprep.subr.bf16.mxu0 0
    %160 = vmatpush1.bf16.msra.mxu0 0
    %161 = vmatprep.subr.bf16.mxu0 0
    %162 = vmatpush1.bf16.msra.mxu0 0
    %163 = vmatprep.subr.bf16.mxu0 0
    %164 = vmatpush1.bf16.msra.mxu0 0
    %165 = vmatprep.subr.bf16.mxu0 0
    %166 = vmatpush1.bf16.msra.mxu0 0
    %167 = vmatprep.subr.bf16.mxu0 0
    %168 = vmatpush1.bf16.msra.mxu0 0
    %169 = vmatprep.subr.bf16.mxu0 0
    %170 = vmatpush1.bf16.msra.mxu0 0
    %171 = vmatprep.subr.bf16.mxu0 0
    %172 = vmatpush1.bf16.msra.mxu0 0
    %173 = vmatprep.subr.bf16.mxu0 0
    %174 = vmatpush1.bf16.msra.mxu0 0
    %175 = vmatprep.subr.bf16.mxu0 0
    %176 = vmatpush1.bf16.msra.mxu0 0
    %177 = vmatprep.mubr.bf16.mxu0 0
    %178 = vmatmul.mubr.bf16.gmra.mrb[0].mxu0 %v143
    %v179 = vpop.f32.mrb[0].mxu0
    %v180 = vadd.f32 0.0, %v179
    %v181 = vpop.f32.mrb[0].mxu0
    %v182 = vpop.f32.mrb[0].mxu0
    %v183 = vadd.f32 0.0, %v182
    %v184 = vpop.f32.mrb[0].mxu0
    %185 = vdwg.mxu0
    %v186 = vpack.c.bf16 %v183, %v180
    %v187 = vld [vmem:[#allocation7] sm:$0xf]
    %v188 = vld [vmem:[#allocation7 + $0x4] sm:$0xf]
    %v189 = vld [vmem:[#allocation7 + $0x8] sm:$0xf]
    %v190 = vld [vmem:[#allocation7 + $0xc] sm:$0xf]
    %v191 = vld [vmem:[#allocation7 + $0x10] sm:$0xf]
    %v192 = vld [vmem:[#allocation7 + $0x14] sm:$0xf]
    %v193 = vld [vmem:[#allocation7 + $0x18] sm:$0xf]
    %v194 = vld [vmem:[#allocation7 + $0x1c] sm:$0xf]
    %v195 = vld [vmem:[#allocation7 + $0x20] sm:$0xf]
    %v196 = vld [vmem:[#allocation7 + $0x24] sm:$0xf]
    %v197 = vld [vmem:[#allocation7 + $0x28] sm:$0xf]
    %v198 = vld [vmem:[#allocation7 + $0x2c] sm:$0xf]
    %v199 = vld [vmem:[#allocation7 + $0x30] sm:$0xf]
    %v200 = vld [vmem:[#allocation7 + $0x34] sm:$0xf]
    %v201 = vld [vmem:[#allocation7 + $0x38] sm:$0xf]
    %v202 = vld [vmem:[#allocation7 + $0x3c] sm:$0xf]
    %v203 = vld [vmem:[%s4] sm:$0x1]
    %v205 = vlaneseq
    %v206 = vshrl.u32 %v205, 7
    %v207 = vsub.s32 0, %v206
    %v208 = vrot.slane %v203, %v207
    %v226 = vunpack.c.l.b16 %v187
    %v227 = vunpack.c.l.b16 %v188
    %v228 = vunpack.c.l.b16 %v189
    %v229 = vunpack.c.l.b16 %v190
    %v230 = vunpack.c.l.b16 %v191
    %v231 = vunpack.c.l.b16 %v192
    %v232 = vunpack.c.l.b16 %v193
    %v233 = vunpack.c.l.b16 %v194
    %v234 = vunpack.c.l.b16 %v195
    %v235 = vunpack.c.l.b16 %v196
    %v236 = vunpack.c.l.b16 %v197
    %v237 = vunpack.c.l.b16 %v198
    %v238 = vunpack.c.l.b16 %v199
    %v239 = vunpack.c.l.b16 %v200
    %v240 = vunpack.c.l.b16 %v201
    %v241 = vunpack.c.l.b16 %v202
    %v242 = vpack.c.b16 %v227, %v226
    %v243 = vpack.c.b16 %v229, %v228
    %v244 = vpack.c.b16 %v231, %v230
    %v245 = vpack.c.b16 %v233, %v232
    %v246 = vpack.c.b16 %v235, %v234
    %v247 = vpack.c.b16 %v237, %v236
    %v248 = vpack.c.b16 %v239, %v238
    %v249 = vpack.c.b16 %v241, %v240
    %258 = vmatprep.subr.bf16.mxu0 0
    %259 = vmatpush1.bf16.msra.mxu0 %v242
    %260 = vmatprep.subr.bf16.mxu0 0
    %261 = vmatpush1.bf16.msra.mxu0 %v243
    %262 = vmatprep.subr.bf16.mxu0 0
    %263 = vmatpush1.bf16.msra.mxu0 %v244
    %264 = vmatprep.subr.bf16.mxu0 0
    %265 = vmatpush1.bf16.msra.mxu0 %v245
    %266 = vmatprep.subr.bf16.mxu0 0
    %267 = vmatpush1.bf16.msra.mxu0 %v246
    %268 = vmatprep.subr.bf16.mxu0 0
    %269 = vmatpush1.bf16.msra.mxu0 %v247
    %270 = vmatprep.subr.bf16.mxu0 0
    %271 = vmatpush1.bf16.msra.mxu0 %v248
    %272 = vmatprep.subr.bf16.mxu0 0
    %273 = vmatpush1.bf16.msra.mxu0 %v249
    %274 = vmatprep.subr.bf16.mxu0 0
    %275 = vmatpush1.bf16.msra.mxu0 0
    %276 = vmatprep.subr.bf16.mxu0 0
    %277 = vmatpush1.bf16.msra.mxu0 0
    %278 = vmatprep.subr.bf16.mxu0 0
    %279 = vmatpush1.bf16.msra.mxu0 0
    %280 = vmatprep.subr.bf16.mxu0 0
    %281 = vmatpush1.bf16.msra.mxu0 0
    %282 = vmatprep.subr.bf16.mxu0 0
    %283 = vmatpush1.bf16.msra.mxu0 0
    %284 = vmatprep.subr.bf16.mxu0 0
    %285 = vmatpush1.bf16.msra.mxu0 0
    %286 = vmatprep.subr.bf16.mxu0 0
    %287 = vmatpush1.bf16.msra.mxu0 0
    %288 = vmatprep.subr.bf16.mxu0 0
    %289 = vmatpush1.bf16.msra.mxu0 0
    %290 = vmatprep.mubr.bf16.mxu0 0
    %291 = vmatmul.mubr.bf16.gmra.mrb[0].mxu0 %v186
    %v292 = vpop.f32.mrb[0].mxu0
    %v293 = vadd.f32 %v208, %v292
    %v294 = vpop.f32.mrb[0].mxu0
    %v295 = vpop.f32.mrb[0].mxu0
    %v296 = vadd.f32 %v208, %v295
    %v297 = vpop.f32.mrb[0].mxu0
    %298 = vdwg.mxu0
    %v299 = vmax.f32 %v293, 0.0
    %v300 = vmax.f32 %v296, 0.0
    %v301 = vpack.c.bf16 %v300, %v299
    %v302 = vld [vmem:[#allocation8] sm:$0xf]
    %v303 = vld [vmem:[#allocation8 + $0x4] sm:$0xf]
    %v304 = vld [vmem:[#allocation8 + $0x8] sm:$0xf]
    %v305 = vld [vmem:[#allocation8 + $0xc] sm:$0xf]
    %v306 = vld [vmem:[#allocation8 + $0x10] sm:$0xf]
    %v307 = vld [vmem:[#allocation8 + $0x14] sm:$0xf]
    %v308 = vld [vmem:[#allocation8 + $0x18] sm:$0xf]
    %v309 = vld [vmem:[#allocation8 + $0x1c] sm:$0xf]
    %v310 = vld [vmem:[#allocation8 + $0x20] sm:$0xf]
    %v311 = vld [vmem:[#allocation8 + $0x24] sm:$0xf]
    %v312 = vld [vmem:[#allocation8 + $0x28] sm:$0xf]
    %v313 = vld [vmem:[#allocation8 + $0x2c] sm:$0xf]
    %v314 = vld [vmem:[#allocation8 + $0x30] sm:$0xf]
    %v315 = vld [vmem:[#allocation8 + $0x34] sm:$0xf]
    %v316 = vld [vmem:[#allocation8 + $0x38] sm:$0xf]
    %v317 = vld [vmem:[#allocation8 + $0x3c] sm:$0xf]
    %v318 = vld [vmem:[%s6] sm:$0x1]
    %v320 = vlaneseq
    %v321 = vshrl.u32 %v320, 7
    %v322 = vsub.s32 0, %v321
    %v323 = vrot.slane %v318, %v322
    %v341 = vunpack.c.l.b16 %v302
    %v342 = vunpack.c.l.b16 %v303
    %v343 = vunpack.c.l.b16 %v304
    %v344 = vunpack.c.l.b16 %v305
    %v345 = vunpack.c.l.b16 %v306
    %v346 = vunpack.c.l.b16 %v307
    %v347 = vunpack.c.l.b16 %v308
    %v348 = vunpack.c.l.b16 %v309
    %v349 = vunpack.c.l.b16 %v310
    %v350 = vunpack.c.l.b16 %v311
    %v351 = vunpack.c.l.b16 %v312
    %v352 = vunpack.c.l.b16 %v313
    %v353 = vunpack.c.l.b16 %v314
    %v354 = vunpack.c.l.b16 %v315
    %v355 = vunpack.c.l.b16 %v316
    %v356 = vunpack.c.l.b16 %v317
    %v357 = vpack.c.b16 %v342, %v341
    %v358 = vpack.c.b16 %v344, %v343
    %v359 = vpack.c.b16 %v346, %v345
    %v360 = vpack.c.b16 %v348, %v347
    %v361 = vpack.c.b16 %v350, %v349
    %v362 = vpack.c.b16 %v352, %v351
    %v363 = vpack.c.b16 %v354, %v353
    %v364 = vpack.c.b16 %v356, %v355
    %373 = vmatprep.subr.bf16.mxu0 0
    %374 = vmatpush1.bf16.msra.mxu0 %v357
    %375 = vmatprep.subr.bf16.mxu0 0
    %376 = vmatpush1.bf16.msra.mxu0 %v358
    %377 = vmatprep.subr.bf16.mxu0 0
    %378 = vmatpush1.bf16.msra.mxu0 %v359
    %379 = vmatprep.subr.bf16.mxu0 0
    %380 = vmatpush1.bf16.msra.mxu0 %v360
    %381 = vmatprep.subr.bf16.mxu0 0
    %382 = vmatpush1.bf16.msra.mxu0 %v361
    %383 = vmatprep.subr.bf16.mxu0 0
    %384 = vmatpush1.bf16.msra.mxu0 %v362
    %385 = vmatprep.subr.bf16.mxu0 0
    %386 = vmatpush1.bf16.msra.mxu0 %v363
    %387 = vmatprep.subr.bf16.mxu0 0
    %388 = vmatpush1.bf16.msra.mxu0 %v364
    %389 = vmatprep.subr.bf16.mxu0 0
    %390 = vmatpush1.bf16.msra.mxu0 0
    %391 = vmatprep.subr.bf16.mxu0 0
    %392 = vmatpush1.bf16.msra.mxu0 0
    %393 = vmatprep.subr.bf16.mxu0 0
    %394 = vmatpush1.bf16.msra.mxu0 0
    %395 = vmatprep.subr.bf16.mxu0 0
    %396 = vmatpush1.bf16.msra.mxu0 0
    %397 = vmatprep.subr.bf16.mxu0 0
    %398 = vmatpush1.bf16.msra.mxu0 0
    %399 = vmatprep.subr.bf16.mxu0 0
    %400 = vmatpush1.bf16.msra.mxu0 0
    %401 = vmatprep.subr.bf16.mxu0 0
    %402 = vmatpush1.bf16.msra.mxu0 0
    %403 = vmatprep.subr.bf16.mxu0 0
    %404 = vmatpush1.bf16.msra.mxu0 0
    %405 = vmatprep.mubr.bf16.mxu0 0
    %406 = vmatmul.mubr.bf16.gmra.mrb[0].mxu0 %v301
    %v407 = vpop.f32.mrb[0].mxu0
    %v408 = vadd.f32 %v323, %v407
    %v409 = vpop.f32.mrb[0].mxu0
    %v410 = vpop.f32.mrb[0].mxu0
    %v411 = vadd.f32 %v323, %v410
    %v412 = vpop.f32.mrb[0].mxu0
    %413 = vdwg.mxu0
    %v414 = vmax.f32 %v408, 0.0
    %v415 = vmax.f32 %v411, 0.0
    %v416 = vpack.c.bf16 %v415, %v414
    %417 = vmatprep.subr.bf16.mxu0 0
    %418 = vmatpush1.bf16.msra.mxu0 %v416
    %419 = vmatprep.subr.bf16.mxu0 0
    %420 = vmatpush1.bf16.msra.mxu0 0
    %421 = vmatprep.subr.bf16.mxu0 0
    %422 = vmatpush1.bf16.msra.mxu0 0
    %423 = vmatprep.subr.bf16.mxu0 0
    %424 = vmatpush1.bf16.msra.mxu0 0
    %425 = vmatprep.subr.bf16.mxu0 0
    %426 = vmatpush1.bf16.msra.mxu0 0
    %427 = vmatprep.subr.bf16.mxu0 0
    %428 = vmatpush1.bf16.msra.mxu0 0
    %429 = vmatprep.subr.bf16.mxu0 0
    %430 = vmatpush1.bf16.msra.mxu0 0
    %431 = vmatprep.subr.bf16.mxu0 0
    %432 = vmatpush1.bf16.msra.mxu0 0
    %433 = vmatprep.subr.bf16.mxu0 0
    %434 = vmatpush1.bf16.msra.mxu0 0
    %435 = vmatprep.subr.bf16.mxu0 0
    %436 = vmatpush1.bf16.msra.mxu0 0
    %437 = vmatprep.subr.bf16.mxu0 0
    %438 = vmatpush1.bf16.msra.mxu0 0
    %439 = vmatprep.subr.bf16.mxu0 0
    %440 = vmatpush1.bf16.msra.mxu0 0
    %441 = vmatprep.subr.bf16.mxu0 0
    %442 = vmatpush1.bf16.msra.mxu0 0
    %443 = vmatprep.subr.bf16.mxu0 0
    %444 = vmatpush1.bf16.msra.mxu0 0
    %445 = vmatprep.subr.bf16.mxu0 0
    %446 = vmatpush1.bf16.msra.mxu0 0
    %447 = vmatprep.subr.bf16.mxu0 0
    %448 = vmatpush1.bf16.msra.mxu0 0
    %449 = vmatprep.mubr.bf16.mxu0 0
    %450 = vmatmul.mubr.bf16.gmra.mrb[0].mxu0 %v143
    %v451 = vpop.f32.mrb[0].mxu0
    %v452 = vadd.f32 0.0, %v451
    %v453 = vpop.f32.mrb[0].mxu0
    %v454 = vpop.f32.mrb[0].mxu0
    %v455 = vadd.f32 0.0, %v454
    %v456 = vpop.f32.mrb[0].mxu0
    %457 = vdwg.mxu0
    %v458 = vpack.c.bf16 %v455, %v452
    %s459 = scalar_lea.vmem [#allocation7], 64
    %v460 = vld [vmem:[%s459] sm:$0xf]
    %v461 = vld [vmem:[%s459 + $0x4] sm:$0xf]
    %v462 = vld [vmem:[%s459 + $0x8] sm:$0xf]
    %v463 = vld [vmem:[%s459 + $0xc] sm:$0xf]
    %v464 = vld [vmem:[%s459 + $0x10] sm:$0xf]
    %v465 = vld [vmem:[%s459 + $0x14] sm:$0xf]
    %v466 = vld [vmem:[%s459 + $0x18] sm:$0xf]
    %v467 = vld [vmem:[%s459 + $0x1c] sm:$0xf]
    %v468 = vld [vmem:[%s459 + $0x20] sm:$0xf]
    %v469 = vld [vmem:[%s459 + $0x24] sm:$0xf]
    %v470 = vld [vmem:[%s459 + $0x28] sm:$0xf]
    %v471 = vld [vmem:[%s459 + $0x2c] sm:$0xf]
    %v472 = vld [vmem:[%s459 + $0x30] sm:$0xf]
    %v473 = vld [vmem:[%s459 + $0x34] sm:$0xf]
    %v474 = vld [vmem:[%s459 + $0x38] sm:$0xf]
    %v475 = vld [vmem:[%s459 + $0x3c] sm:$0xf]
    %s476 = scalar_lea.vmem %s4, 1
    %v477 = vld [vmem:[%s476] sm:$0x1]
    %v479 = vlaneseq
    %v480 = vshrl.u32 %v479, 7
    %v481 = vsub.s32 0, %v480
    %v482 = vrot.slane %v477, %v481
    %v500 = vunpack.c.l.b16 %v460
    %v501 = vunpack.c.l.b16 %v461
    %v502 = vunpack.c.l.b16 %v462
    %v503 = vunpack.c.l.b16 %v463
    %v504 = vunpack.c.l.b16 %v464
    %v505 = vunpack.c.l.b16 %v465
    %v506 = vunpack.c.l.b16 %v466
    %v507 = vunpack.c.l.b16 %v467
    %v508 = vunpack.c.l.b16 %v468
    %v509 = vunpack.c.l.b16 %v469
    %v510 = vunpack.c.l.b16 %v470
    %v511 = vunpack.c.l.b16 %v471
    %v512 = vunpack.c.l.b16 %v472
    %v513 = vunpack.c.l.b16 %v473
    %v514 = vunpack.c.l.b16 %v474
    %v515 = vunpack.c.l.b16 %v475
    %v516 = vpack.c.b16 %v501, %v500
    %v517 = vpack.c.b16 %v503, %v502
    %v518 = vpack.c.b16 %v505, %v504
    %v519 = vpack.c.b16 %v507, %v506
    %v520 = vpack.c.b16 %v509, %v508
    %v521 = vpack.c.b16 %v511, %v510
    %v522 = vpack.c.b16 %v513, %v512
    %v523 = vpack.c.b16 %v515, %v514
    %532 = vmatprep.subr.bf16.mxu0 0
    %533 = vmatpush1.bf16.msra.mxu0 %v516
    %534 = vmatprep.subr.bf16.mxu0 0
    %535 = vmatpush1.bf16.msra.mxu0 %v517
    %536 = vmatprep.subr.bf16.mxu0 0
    %537 = vmatpush1.bf16.msra.mxu0 %v518
    %538 = vmatprep.subr.bf16.mxu0 0
    %539 = vmatpush1.bf16.msra.mxu0 %v519
    %540 = vmatprep.subr.bf16.mxu0 0
    %541 = vmatpush1.bf16.msra.mxu0 %v520
    %542 = vmatprep.subr.bf16.mxu0 0
    %543 = vmatpush1.bf16.msra.mxu0 %v521
    %544 = vmatprep.subr.bf16.mxu0 0
    %545 = vmatpush1.bf16.msra.mxu0 %v522
    %546 = vmatprep.subr.bf16.mxu0 0
    %547 = vmatpush1.bf16.msra.mxu0 %v523
    %548 = vmatprep.subr.bf16.mxu0 0
    %549 = vmatpush1.bf16.msra.mxu0 0
    %550 = vmatprep.subr.bf16.mxu0 0
    %551 = vmatpush1.bf16.msra.mxu0 0
    %552 = vmatprep.subr.bf16.mxu0 0
    %553 = vmatpush1.bf16.msra.mxu0 0
    %554 = vmatprep.subr.bf16.mxu0 0
    %555 = vmatpush1.bf16.msra.mxu0 0
    %556 = vmatprep.subr.bf16.mxu0 0
    %557 = vmatpush1.bf16.msra.mxu0 0
    %558 = vmatprep.subr.bf16.mxu0 0
    %559 = vmatpush1.bf16.msra.mxu0 0
    %560 = vmatprep.subr.bf16.mxu0 0
    %561 = vmatpush1.bf16.msra.mxu0 0
    %562 = vmatprep.subr.bf16.mxu0 0
    %563 = vmatpush1.bf16.msra.mxu0 0
    %564 = vmatprep.mubr.bf16.mxu0 0
    %565 = vmatmul.mubr.bf16.gmra.mrb[0].mxu0 %v458
    %v566 = vpop.f32.mrb[0].mxu0
    %v567 = vadd.f32 %v482, %v566
    %v568 = vpop.f32.mrb[0].mxu0
    %v569 = vpop.f32.mrb[0].mxu0
    %v570 = vadd.f32 %v482, %v569
    %v571 = vpop.f32.mrb[0].mxu0
    %572 = vdwg.mxu0
    %v573 = vmax.f32 %v567, 0.0
    %v574 = vmax.f32 %v570, 0.0
    %v575 = vpack.c.bf16 %v574, %v573
    %s576 = scalar_lea.vmem [#allocation8], 64
    %v577 = vld [vmem:[%s576] sm:$0xf]
    %v578 = vld [vmem:[%s576 + $0x4] sm:$0xf]
    %v579 = vld [vmem:[%s576 + $0x8] sm:$0xf]
    %v580 = vld [vmem:[%s576 + $0xc] sm:$0xf]
    %v581 = vld [vmem:[%s576 + $0x10] sm:$0xf]
    %v582 = vld [vmem:[%s576 + $0x14] sm:$0xf]
    %v583 = vld [vmem:[%s576 + $0x18] sm:$0xf]
    %v584 = vld [vmem:[%s576 + $0x1c] sm:$0xf]
    %v585 = vld [vmem:[%s576 + $0x20] sm:$0xf]
    %v586 = vld [vmem:[%s576 + $0x24] sm:$0xf]
    %v587 = vld [vmem:[%s576 + $0x28] sm:$0xf]
    %v588 = vld [vmem:[%s576 + $0x2c] sm:$0xf]
    %v589 = vld [vmem:[%s576 + $0x30] sm:$0xf]
    %v590 = vld [vmem:[%s576 + $0x34] sm:$0xf]
    %v591 = vld [vmem:[%s576 + $0x38] sm:$0xf]
    %v592 = vld [vmem:[%s576 + $0x3c] sm:$0xf]
    %s593 = scalar_lea.vmem %s6, 1
    %v594 = vld [vmem:[%s593] sm:$0x1]
    %v596 = vlaneseq
    %v597 = vshrl.u32 %v596, 7
    %v598 = vsub.s32 0, %v597
    %v599 = vrot.slane %v594, %v598
    %v617 = vunpack.c.l.b16 %v577
    %v618 = vunpack.c.l.b16 %v578
    %v619 = vunpack.c.l.b16 %v579
    %v620 = vunpack.c.l.b16 %v580
    %v621 = vunpack.c.l.b16 %v581
    %v622 = vunpack.c.l.b16 %v582
    %v623 = vunpack.c.l.b16 %v583
    %v624 = vunpack.c.l.b16 %v584
    %v625 = vunpack.c.l.b16 %v585
    %v626 = vunpack.c.l.b16 %v586
    %v627 = vunpack.c.l.b16 %v587
    %v628 = vunpack.c.l.b16 %v588
    %v629 = vunpack.c.l.b16 %v589
    %v630 = vunpack.c.l.b16 %v590
    %v631 = vunpack.c.l.b16 %v591
    %v632 = vunpack.c.l.b16 %v592
    %v633 = vpack.c.b16 %v618, %v617
    %v634 = vpack.c.b16 %v620, %v619
    %v635 = vpack.c.b16 %v622, %v621
    %v636 = vpack.c.b16 %v624, %v623
    %v637 = vpack.c.b16 %v626, %v625
    %v638 = vpack.c.b16 %v628, %v627
    %v639 = vpack.c.b16 %v630, %v629
    %v640 = vpack.c.b16 %v632, %v631
    %649 = vmatprep.subr.bf16.mxu0 0
    %650 = vmatpush1.bf16.msra.mxu0 %v633
    %651 = vmatprep.subr.bf16.mxu0 0
    %652 = vmatpush1.bf16.msra.mxu0 %v634
    %653 = vmatprep.subr.bf16.mxu0 0
    %654 = vmatpush1.bf16.msra.mxu0 %v635
    %655 = vmatprep.subr.bf16.mxu0 0
    %656 = vmatpush1.bf16.msra.mxu0 %v636
    %657 = vmatprep.subr.bf16.mxu0 0
    %658 = vmatpush1.bf16.msra.mxu0 %v637
    %659 = vmatprep.subr.bf16.mxu0 0
    %660 = vmatpush1.bf16.msra.mxu0 %v638
    %661 = vmatprep.subr.bf16.mxu0 0
    %662 = vmatpush1.bf16.msra.mxu0 %v639
    %663 = vmatprep.subr.bf16.mxu0 0
    %664 = vmatpush1.bf16.msra.mxu0 %v640
    %665 = vmatprep.subr.bf16.mxu0 0
    %666 = vmatpush1.bf16.msra.mxu0 0
    %667 = vmatprep.subr.bf16.mxu0 0
    %668 = vmatpush1.bf16.msra.mxu0 0
    %669 = vmatprep.subr.bf16.mxu0 0
    %670 = vmatpush1.bf16.msra.mxu0 0
    %671 = vmatprep.subr.bf16.mxu0 0
    %672 = vmatpush1.bf16.msra.mxu0 0
    %673 = vmatprep.subr.bf16.mxu0 0
    %674 = vmatpush1.bf16.msra.mxu0 0
    %675 = vmatprep.subr.bf16.mxu0 0
    %676 = vmatpush1.bf16.msra.mxu0 0
    %677 = vmatprep.subr.bf16.mxu0 0
    %678 = vmatpush1.bf16.msra.mxu0 0
    %679 = vmatprep.subr.bf16.mxu0 0
    %680 = vmatpush1.bf16.msra.mxu0 0
    %681 = vmatprep.mubr.bf16.mxu0 0
    %682 = vmatmul.mubr.bf16.gmra.mrb[0].mxu0 %v575
    %v683 = vpop.f32.mrb[0].mxu0
    %v684 = vadd.f32 %v599, %v683
    %v685 = vpop.f32.mrb[0].mxu0
    %v686 = vpop.f32.mrb[0].mxu0
    %v687 = vadd.f32 %v599, %v686
    %v688 = vpop.f32.mrb[0].mxu0
    %689 = vdwg.mxu0
    %v690 = vmax.f32 %v684, 0.0
    %v691 = vmax.f32 %v687, 0.0
    %v692 = vpack.c.bf16 %v691, %v690
    %693 = vmatprep.subr.bf16.mxu0 0
    %694 = vmatpush1.bf16.msra.mxu0 %v692
    %695 = vmatprep.subr.bf16.mxu0 0
    %696 = vmatpush1.bf16.msra.mxu0 0
    %697 = vmatprep.subr.bf16.mxu0 0
    %698 = vmatpush1.bf16.msra.mxu0 0
    %699 = vmatprep.subr.bf16.mxu0 0
    %700 = vmatpush1.bf16.msra.mxu0 0
    %701 = vmatprep.subr.bf16.mxu0 0
    %702 = vmatpush1.bf16.msra.mxu0 0
    %703 = vmatprep.subr.bf16.mxu0 0
    %704 = vmatpush1.bf16.msra.mxu0 0
    %705 = vmatprep.subr.bf16.mxu0 0
    %706 = vmatpush1.bf16.msra.mxu0 0
    %707 = vmatprep.subr.bf16.mxu0 0
    %708 = vmatpush1.bf16.msra.mxu0 0
    %709 = vmatprep.subr.bf16.mxu0 0
    %710 = vmatpush1.bf16.msra.mxu0 0
    %711 = vmatprep.subr.bf16.mxu0 0
    %712 = vmatpush1.bf16.msra.mxu0 0
    %713 = vmatprep.subr.bf16.mxu0 0
    %714 = vmatpush1.bf16.msra.mxu0 0
    %715 = vmatprep.subr.bf16.mxu0 0
    %716 = vmatpush1.bf16.msra.mxu0 0
    %717 = vmatprep.subr.bf16.mxu0 0
    %718 = vmatpush1.bf16.msra.mxu0 0
    %719 = vmatprep.subr.bf16.mxu0 0
    %720 = vmatpush1.bf16.msra.mxu0 0
    %721 = vmatprep.subr.bf16.mxu0 0
    %722 = vmatpush1.bf16.msra.mxu0 0
    %723 = vmatprep.subr.bf16.mxu0 0
    %724 = vmatpush1.bf16.msra.mxu0 0
    %725 = vmatprep.mubr.bf16.mxu0 0
    %726 = vmatmul.mubr.bf16.gmra.mrb[0].mxu0 %v143
    %v727 = vpop.f32.mrb[0].mxu0
    %v728 = vadd.f32 0.0, %v727
    %v729 = vpop.f32.mrb[0].mxu0
    %v730 = vpop.f32.mrb[0].mxu0
    %v731 = vadd.f32 0.0, %v730
    %v732 = vpop.f32.mrb[0].mxu0
    %733 = vdwg.mxu0
    %v734 = vpack.c.bf16 %v731, %v728
    %s735 = scalar_lea.vmem [#allocation7], 128
    %v736 = vld [vmem:[%s735] sm:$0xf]
    %v737 = vld [vmem:[%s735 + $0x4] sm:$0xf]
    %v738 = vld [vmem:[%s735 + $0x8] sm:$0xf]
    %v739 = vld [vmem:[%s735 + $0xc] sm:$0xf]
    %v740 = vld [vmem:[%s735 + $0x10] sm:$0xf]
    %v741 = vld [vmem:[%s735 + $0x14] sm:$0xf]
    %v742 = vld [vmem:[%s735 + $0x18] sm:$0xf]
    %v743 = vld [vmem:[%s735 + $0x1c] sm:$0xf]
    %v744 = vld [vmem:[%s735 + $0x20] sm:$0xf]
    %v745 = vld [vmem:[%s735 + $0x24] sm:$0xf]
    %v746 = vld [vmem:[%s735 + $0x28] sm:$0xf]
    %v747 = vld [vmem:[%s735 + $0x2c] sm:$0xf]
    %v748 = vld [vmem:[%s735 + $0x30] sm:$0xf]
    %v749 = vld [vmem:[%s735 + $0x34] sm:$0xf]
    %v750 = vld [vmem:[%s735 + $0x38] sm:$0xf]
    %v751 = vld [vmem:[%s735 + $0x3c] sm:$0xf]
    %s752 = scalar_lea.vmem %s4, 2
    %v753 = vld [vmem:[%s752] sm:$0x1]
    %v755 = vlaneseq
    %v756 = vshrl.u32 %v755, 7
    %v757 = vsub.s32 0, %v756
    %v758 = vrot.slane %v753, %v757
    %v776 = vunpack.c.l.b16 %v736
    %v777 = vunpack.c.l.b16 %v737
    %v778 = vunpack.c.l.b16 %v738
    %v779 = vunpack.c.l.b16 %v739
    %v780 = vunpack.c.l.b16 %v740
    %v781 = vunpack.c.l.b16 %v741
    %v782 = vunpack.c.l.b16 %v742
    %v783 = vunpack.c.l.b16 %v743
    %v784 = vunpack.c.l.b16 %v744
    %v785 = vunpack.c.l.b16 %v745
    %v786 = vunpack.c.l.b16 %v746
    %v787 = vunpack.c.l.b16 %v747
    %v788 = vunpack.c.l.b16 %v748
    %v789 = vunpack.c.l.b16 %v749
    %v790 = vunpack.c.l.b16 %v750
    %v791 = vunpack.c.l.b16 %v751
    %v792 = vpack.c.b16 %v777, %v776
    %v793 = vpack.c.b16 %v779, %v778
    %v794 = vpack.c.b16 %v781, %v780
    %v795 = vpack.c.b16 %v783, %v782
    %v796 = vpack.c.b16 %v785, %v784
    %v797 = vpack.c.b16 %v787, %v786
    %v798 = vpack.c.b16 %v789, %v788
    %v799 = vpack.c.b16 %v791, %v790
    %808 = vmatprep.subr.bf16.mxu0 0
    %809 = vmatpush1.bf16.msra.mxu0 %v792
    %810 = vmatprep.subr.bf16.mxu0 0
    %811 = vmatpush1.bf16.msra.mxu0 %v793
    %812 = vmatprep.subr.bf16.mxu0 0
    %813 = vmatpush1.bf16.msra.mxu0 %v794
    %814 = vmatprep.subr.bf16.mxu0 0
    %815 = vmatpush1.bf16.msra.mxu0 %v795
    %816 = vmatprep.subr.bf16.mxu0 0
    %817 = vmatpush1.bf16.msra.mxu0 %v796
    %818 = vmatprep.subr.bf16.mxu0 0
    %819 = vmatpush1.bf16.msra.mxu0 %v797
    %820 = vmatprep.subr.bf16.mxu0 0
    %821 = vmatpush1.bf16.msra.mxu0 %v798
    %822 = vmatprep.subr.bf16.mxu0 0
    %823 = vmatpush1.bf16.msra.mxu0 %v799
    %824 = vmatprep.subr.bf16.mxu0 0
    %825 = vmatpush1.bf16.msra.mxu0 0
    %826 = vmatprep.subr.bf16.mxu0 0
    %827 = vmatpush1.bf16.msra.mxu0 0
    %828 = vmatprep.subr.bf16.mxu0 0
    %829 = vmatpush1.bf16.msra.mxu0 0
    %830 = vmatprep.subr.bf16.mxu0 0
    %831 = vmatpush1.bf16.msra.mxu0 0
    %832 = vmatprep.subr.bf16.mxu0 0
    %833 = vmatpush1.bf16.msra.mxu0 0
    %834 = vmatprep.subr.bf16.mxu0 0
    %835 = vmatpush1.bf16.msra.mxu0 0
    %836 = vmatprep.subr.bf16.mxu0 0
    %837 = vmatpush1.bf16.msra.mxu0 0
    %838 = vmatprep.subr.bf16.mxu0 0
    %839 = vmatpush1.bf16.msra.mxu0 0
    %840 = vmatprep.mubr.bf16.mxu0 0
    %841 = vmatmul.mubr.bf16.gmra.mrb[0].mxu0 %v734
    %v842 = vpop.f32.mrb[0].mxu0
    %v843 = vadd.f32 %v758, %v842
    %v844 = vpop.f32.mrb[0].mxu0
    %v845 = vpop.f32.mrb[0].mxu0
    %v846 = vadd.f32 %v758, %v845
    %v847 = vpop.f32.mrb[0].mxu0
    %848 = vdwg.mxu0
    %v849 = vmax.f32 %v843, 0.0
    %v850 = vmax.f32 %v846, 0.0
    %v851 = vpack.c.bf16 %v850, %v849
    %s852 = scalar_lea.vmem [#allocation8], 128
    %v853 = vld [vmem:[%s852] sm:$0xf]
    %v854 = vld [vmem:[%s852 + $0x4] sm:$0xf]
    %v855 = vld [vmem:[%s852 + $0x8] sm:$0xf]
    %v856 = vld [vmem:[%s852 + $0xc] sm:$0xf]
    %v857 = vld [vmem:[%s852 + $0x10] sm:$0xf]
    %v858 = vld [vmem:[%s852 + $0x14] sm:$0xf]
    %v859 = vld [vmem:[%s852 + $0x18] sm:$0xf]
    %v860 = vld [vmem:[%s852 + $0x1c] sm:$0xf]
    %v861 = vld [vmem:[%s852 + $0x20] sm:$0xf]
    %v862 = vld [vmem:[%s852 + $0x24] sm:$0xf]
    %v863 = vld [vmem:[%s852 + $0x28] sm:$0xf]
    %v864 = vld [vmem:[%s852 + $0x2c] sm:$0xf]
    %v865 = vld [vmem:[%s852 + $0x30] sm:$0xf]
    %v866 = vld [vmem:[%s852 + $0x34] sm:$0xf]
    %v867 = vld [vmem:[%s852 + $0x38] sm:$0xf]
    %v868 = vld [vmem:[%s852 + $0x3c] sm:$0xf]
    %s869 = scalar_lea.vmem %s6, 2
    %v870 = vld [vmem:[%s869] sm:$0x1]
    %v872 = vlaneseq
    %v873 = vshrl.u32 %v872, 7
    %v874 = vsub.s32 0, %v873
    %v875 = vrot.slane %v870, %v874
    %v893 = vunpack.c.l.b16 %v853
    %v894 = vunpack.c.l.b16 %v854
    %v895 = vunpack.c.l.b16 %v855
    %v896 = vunpack.c.l.b16 %v856
    %v897 = vunpack.c.l.b16 %v857
    %v898 = vunpack.c.l.b16 %v858
    %v899 = vunpack.c.l.b16 %v859
    %v900 = vunpack.c.l.b16 %v860
    %v901 = vunpack.c.l.b16 %v861
    %v902 = vunpack.c.l.b16 %v862
    %v903 = vunpack.c.l.b16 %v863
    %v904 = vunpack.c.l.b16 %v864
    %v905 = vunpack.c.l.b16 %v865
    %v906 = vunpack.c.l.b16 %v866
    %v907 = vunpack.c.l.b16 %v867
    %v908 = vunpack.c.l.b16 %v868
    %v909 = vpack.c.b16 %v894, %v893
    %v910 = vpack.c.b16 %v896, %v895
    %v911 = vpack.c.b16 %v898, %v897
    %v912 = vpack.c.b16 %v900, %v899
    %v913 = vpack.c.b16 %v902, %v901
    %v914 = vpack.c.b16 %v904, %v903
    %v915 = vpack.c.b16 %v906, %v905
    %v916 = vpack.c.b16 %v908, %v907
    %925 = vmatprep.subr.bf16.mxu0 0
    %926 = vmatpush1.bf16.msra.mxu0 %v909
    %927 = vmatprep.subr.bf16.mxu0 0
    %928 = vmatpush1.bf16.msra.mxu0 %v910
    %929 = vmatprep.subr.bf16.mxu0 0
    %930 = vmatpush1.bf16.msra.mxu0 %v911
    %931 = vmatprep.subr.bf16.mxu0 0
    %932 = vmatpush1.bf16.msra.mxu0 %v912
    %933 = vmatprep.subr.bf16.mxu0 0
    %934 = vmatpush1.bf16.msra.mxu0 %v913
    %935 = vmatprep.subr.bf16.mxu0 0
    %936 = vmatpush1.bf16.msra.mxu0 %v914
    %937 = vmatprep.subr.bf16.mxu0 0
    %938 = vmatpush1.bf16.msra.mxu0 %v915
    %939 = vmatprep.subr.bf16.mxu0 0
    %940 = vmatpush1.bf16.msra.mxu0 %v916
    %941 = vmatprep.subr.bf16.mxu0 0
    %942 = vmatpush1.bf16.msra.mxu0 0
    %943 = vmatprep.subr.bf16.mxu0 0
    %944 = vmatpush1.bf16.msra.mxu0 0
    %945 = vmatprep.subr.bf16.mxu0 0
    %946 = vmatpush1.bf16.msra.mxu0 0
    %947 = vmatprep.subr.bf16.mxu0 0
    %948 = vmatpush1.bf16.msra.mxu0 0
    %949 = vmatprep.subr.bf16.mxu0 0
    %950 = vmatpush1.bf16.msra.mxu0 0
    %951 = vmatprep.subr.bf16.mxu0 0
    %952 = vmatpush1.bf16.msra.mxu0 0
    %953 = vmatprep.subr.bf16.mxu0 0
    %954 = vmatpush1.bf16.msra.mxu0 0
    %955 = vmatprep.subr.bf16.mxu0 0
    %956 = vmatpush1.bf16.msra.mxu0 0
    %957 = vmatprep.mubr.bf16.mxu0 0
    %958 = vmatmul.mubr.bf16.gmra.mrb[0].mxu0 %v851
    %v959 = vpop.f32.mrb[0].mxu0
    %v960 = vadd.f32 %v875, %v959
    %v961 = vpop.f32.mrb[0].mxu0
    %v962 = vpop.f32.mrb[0].mxu0
    %v963 = vadd.f32 %v875, %v962
    %v964 = vpop.f32.mrb[0].mxu0
    %965 = vdwg.mxu0
    %v966 = vpack.c.bf16 %v963, %v960
    %967 = vst [vmem:[#allocation13] sm:$0xff] %v960
    %968 = vst [vmem:[#allocation13 + $0x8] sm:$0xff] %v963
    %v969 = vld [vmem:[%s2] sm:$0x1]
    %v971 = vsel %vm141, %v969, 0
    %973 = vmatprep.subr.bf16.mxu0 0
    %974 = vmatpush1.bf16.msra.mxu0 %v966
    %975 = vmatprep.subr.bf16.mxu0 0
    %976 = vmatpush1.bf16.msra.mxu0 0
    %977 = vmatprep.subr.bf16.mxu0 0
    %978 = vmatpush1.bf16.msra.mxu0 0
    %979 = vmatprep.subr.bf16.mxu0 0
    %980 = vmatpush1.bf16.msra.mxu0 0
    %981 = vmatprep.subr.bf16.mxu0 0
    %982 = vmatpush1.bf16.msra.mxu0 0
    %983 = vmatprep.subr.bf16.mxu0 0
    %984 = vmatpush1.bf16.msra.mxu0 0
    %985 = vmatprep.subr.bf16.mxu0 0
    %986 = vmatpush1.bf16.msra.mxu0 0
    %987 = vmatprep.subr.bf16.mxu0 0
    %988 = vmatpush1.bf16.msra.mxu0 0
    %989 = vmatprep.subr.bf16.mxu0 0
    %990 = vmatpush1.bf16.msra.mxu0 0
    %991 = vmatprep.subr.bf16.mxu0 0
    %992 = vmatpush1.bf16.msra.mxu0 0
    %993 = vmatprep.subr.bf16.mxu0 0
    %994 = vmatpush1.bf16.msra.mxu0 0
    %995 = vmatprep.subr.bf16.mxu0 0
    %996 = vmatpush1.bf16.msra.mxu0 0
    %997 = vmatprep.subr.bf16.mxu0 0
    %998 = vmatpush1.bf16.msra.mxu0 0
    %999 = vmatprep.subr.bf16.mxu0 0
    %1000 = vmatpush1.bf16.msra.mxu0 0
    %1001 = vmatprep.subr.bf16.mxu0 0
    %1002 = vmatpush1.bf16.msra.mxu0 0
    %1003 = vmatprep.subr.bf16.mxu0 0
    %1004 = vmatpush1.bf16.msra.mxu0 0
    %1005 = vmatprep.mubr.bf16.mxu0 0
    %1006 = vmatmul.mubr.bf16.gmra.mrb[0].mxu0 %v971
    %v1007 = vpop.f32.mrb[0].mxu0
    %v1008 = vadd.f32 0.0, %v1007
    %v1009 = vpop.f32.mrb[0].mxu0
    %v1010 = vpop.f32.mrb[0].mxu0
    %v1011 = vpop.f32.mrb[0].mxu0
    %1012 = vdwg.mxu0
    %1013 = vst [vmem:[#allocation14] sm:$0x3] %v1008
    %v1014 = vpack.c.bf16 %v1008, %v1008
    %v1015 = vld [vmem:[#allocation10] sm:$0xf]
    %v1016 = vld [vmem:[#allocation10 + $0x4] sm:$0xf]
    %v1017 = vld [vmem:[#allocation10 + $0x8] sm:$0xf]
    %v1018 = vld [vmem:[#allocation10 + $0xc] sm:$0xf]
    %v1019 = vld [vmem:[#allocation10 + $0x10] sm:$0xf]
    %v1020 = vld [vmem:[#allocation10 + $0x14] sm:$0xf]
    %v1021 = vld [vmem:[#allocation10 + $0x18] sm:$0xf]
    %v1022 = vld [vmem:[#allocation10 + $0x1c] sm:$0xf]
    %v1023 = vld [vmem:[#allocation10 + $0x20] sm:$0xf]
    %v1024 = vld [vmem:[#allocation10 + $0x24] sm:$0xf]
    %v1025 = vld [vmem:[#allocation10 + $0x28] sm:$0xf]
    %v1026 = vld [vmem:[#allocation10 + $0x2c] sm:$0xf]
    %v1027 = vld [vmem:[#allocation10 + $0x30] sm:$0xf]
    %v1028 = vld [vmem:[#allocation10 + $0x34] sm:$0xf]
    %v1029 = vld [vmem:[#allocation10 + $0x38] sm:$0xf]
    %v1030 = vld [vmem:[#allocation10 + $0x3c] sm:$0xf]
    %v1031 = vld [vmem:[%s8] sm:$0x1]
    %v1033 = vlaneseq
    %v1034 = vshrl.u32 %v1033, 7
    %v1035 = vsub.s32 0, %v1034
    %v1036 = vrot.slane %v1031, %v1035
    %v1054 = vunpack.c.l.b16 %v1015
    %v1055 = vunpack.c.l.b16 %v1016
    %v1056 = vunpack.c.l.b16 %v1017
    %v1057 = vunpack.c.l.b16 %v1018
    %v1058 = vunpack.c.l.b16 %v1019
    %v1059 = vunpack.c.l.b16 %v1020
    %v1060 = vunpack.c.l.b16 %v1021
    %v1061 = vunpack.c.l.b16 %v1022
    %v1062 = vunpack.c.l.b16 %v1023
    %v1063 = vunpack.c.l.b16 %v1024
    %v1064 = vunpack.c.l.b16 %v1025
    %v1065 = vunpack.c.l.b16 %v1026
    %v1066 = vunpack.c.l.b16 %v1027
    %v1067 = vunpack.c.l.b16 %v1028
    %v1068 = vunpack.c.l.b16 %v1029
    %v1069 = vunpack.c.l.b16 %v1030
    %v1070 = vpack.c.b16 %v1055, %v1054
    %v1071 = vpack.c.b16 %v1057, %v1056
    %v1072 = vpack.c.b16 %v1059, %v1058
    %v1073 = vpack.c.b16 %v1061, %v1060
    %v1074 = vpack.c.b16 %v1063, %v1062
    %v1075 = vpack.c.b16 %v1065, %v1064
    %v1076 = vpack.c.b16 %v1067, %v1066
    %v1077 = vpack.c.b16 %v1069, %v1068
    %1086 = vmatprep.subr.bf16.mxu0 0
    %1087 = vmatpush1.bf16.msra.mxu0 %v1070
    %1088 = vmatprep.subr.bf16.mxu0 0
    %1089 = vmatpush1.bf16.msra.mxu0 %v1071
    %1090 = vmatprep.subr.bf16.mxu0 0
    %1091 = vmatpush1.bf16.msra.mxu0 %v1072
    %1092 = vmatprep.subr.bf16.mxu0 0
    %1093 = vmatpush1.bf16.msra.mxu0 %v1073
    %1094 = vmatprep.subr.bf16.mxu0 0
    %1095 = vmatpush1.bf16.msra.mxu0 %v1074
    %1096 = vmatprep.subr.bf16.mxu0 0
    %1097 = vmatpush1.bf16.msra.mxu0 %v1075
    %1098 = vmatprep.subr.bf16.mxu0 0
    %1099 = vmatpush1.bf16.msra.mxu0 %v1076
    %1100 = vmatprep.subr.bf16.mxu0 0
    %1101 = vmatpush1.bf16.msra.mxu0 %v1077
    %1102 = vmatprep.subr.bf16.mxu0 0
    %1103 = vmatpush1.bf16.msra.mxu0 0
    %1104 = vmatprep.subr.bf16.mxu0 0
    %1105 = vmatpush1.bf16.msra.mxu0 0
    %1106 = vmatprep.subr.bf16.mxu0 0
    %1107 = vmatpush1.bf16.msra.mxu0 0
    %1108 = vmatprep.subr.bf16.mxu0 0
    %1109 = vmatpush1.bf16.msra.mxu0 0
    %1110 = vmatprep.subr.bf16.mxu0 0
    %1111 = vmatpush1.bf16.msra.mxu0 0
    %1112 = vmatprep.subr.bf16.mxu0 0
    %1113 = vmatpush1.bf16.msra.mxu0 0
    %1114 = vmatprep.subr.bf16.mxu0 0
    %1115 = vmatpush1.bf16.msra.mxu0 0
    %1116 = vmatprep.subr.bf16.mxu0 0
    %1117 = vmatpush1.bf16.msra.mxu0 0
    %1118 = vmatprep.mubr.bf16.mxu0 0
    %1119 = vmatmul.mubr.bf16.gmra.mrb[0].mxu0 %v1014
    %v1120 = vpop.f32.mrb[0].mxu0
    %v1121 = vadd.f32 %v1036, %v1120
    %v1122 = vpop.f32.mrb[0].mxu0
    %v1123 = vpop.f32.mrb[0].mxu0
    %v1124 = vpop.f32.mrb[0].mxu0
    %1125 = vdwg.mxu0
    %v1126 = vmax.f32 %v1121, 0.0
    %v1127 = vpack.c.bf16 %v1126, %v1126
    %v1128 = vld [vmem:[#allocation11] sm:$0xf]
    %v1129 = vld [vmem:[#allocation11 + $0x4] sm:$0xf]
    %v1130 = vld [vmem:[#allocation11 + $0x8] sm:$0xf]
    %v1131 = vld [vmem:[#allocation11 + $0xc] sm:$0xf]
    %v1132 = vld [vmem:[#allocation11 + $0x10] sm:$0xf]
    %v1133 = vld [vmem:[#allocation11 + $0x14] sm:$0xf]
    %v1134 = vld [vmem:[#allocation11 + $0x18] sm:$0xf]
    %v1135 = vld [vmem:[#allocation11 + $0x1c] sm:$0xf]
    %v1136 = vld [vmem:[#allocation11 + $0x20] sm:$0xf]
    %v1137 = vld [vmem:[#allocation11 + $0x24] sm:$0xf]
    %v1138 = vld [vmem:[#allocation11 + $0x28] sm:$0xf]
    %v1139 = vld [vmem:[#allocation11 + $0x2c] sm:$0xf]
    %v1140 = vld [vmem:[#allocation11 + $0x30] sm:$0xf]
    %v1141 = vld [vmem:[#allocation11 + $0x34] sm:$0xf]
    %v1142 = vld [vmem:[#allocation11 + $0x38] sm:$0xf]
    %v1143 = vld [vmem:[#allocation11 + $0x3c] sm:$0xf]
    %v1144 = vld [vmem:[%s10] sm:$0x1]
    %v1146 = vlaneseq
    %v1147 = vshrl.u32 %v1146, 7
    %v1148 = vsub.s32 0, %v1147
    %v1149 = vrot.slane %v1144, %v1148
    %v1167 = vunpack.c.l.b16 %v1128
    %v1168 = vunpack.c.l.b16 %v1129
    %v1169 = vunpack.c.l.b16 %v1130
    %v1170 = vunpack.c.l.b16 %v1131
    %v1171 = vunpack.c.l.b16 %v1132
    %v1172 = vunpack.c.l.b16 %v1133
    %v1173 = vunpack.c.l.b16 %v1134
    %v1174 = vunpack.c.l.b16 %v1135
    %v1175 = vunpack.c.l.b16 %v1136
    %v1176 = vunpack.c.l.b16 %v1137
    %v1177 = vunpack.c.l.b16 %v1138
    %v1178 = vunpack.c.l.b16 %v1139
    %v1179 = vunpack.c.l.b16 %v1140
    %v1180 = vunpack.c.l.b16 %v1141
    %v1181 = vunpack.c.l.b16 %v1142
    %v1182 = vunpack.c.l.b16 %v1143
    %v1183 = vpack.c.b16 %v1168, %v1167
    %v1184 = vpack.c.b16 %v1170, %v1169
    %v1185 = vpack.c.b16 %v1172, %v1171
    %v1186 = vpack.c.b16 %v1174, %v1173
    %v1187 = vpack.c.b16 %v1176, %v1175
    %v1188 = vpack.c.b16 %v1178, %v1177
    %v1189 = vpack.c.b16 %v1180, %v1179
    %v1190 = vpack.c.b16 %v1182, %v1181
    %1199 = vmatprep.subr.bf16.mxu0 0
    %1200 = vmatpush1.bf16.msra.mxu0 %v1183
    %1201 = vmatprep.subr.bf16.mxu0 0
    %1202 = vmatpush1.bf16.msra.mxu0 %v1184
    %1203 = vmatprep.subr.bf16.mxu0 0
    %1204 = vmatpush1.bf16.msra.mxu0 %v1185
    %1205 = vmatprep.subr.bf16.mxu0 0
    %1206 = vmatpush1.bf16.msra.mxu0 %v1186
    %1207 = vmatprep.subr.bf16.mxu0 0
    %1208 = vmatpush1.bf16.msra.mxu0 %v1187
    %1209 = vmatprep.subr.bf16.mxu0 0
    %1210 = vmatpush1.bf16.msra.mxu0 %v1188
    %1211 = vmatprep.subr.bf16.mxu0 0
    %1212 = vmatpush1.bf16.msra.mxu0 %v1189
    %1213 = vmatprep.subr.bf16.mxu0 0
    %1214 = vmatpush1.bf16.msra.mxu0 %v1190
    %1215 = vmatprep.subr.bf16.mxu0 0
    %1216 = vmatpush1.bf16.msra.mxu0 0
    %1217 = vmatprep.subr.bf16.mxu0 0
    %1218 = vmatpush1.bf16.msra.mxu0 0
    %1219 = vmatprep.subr.bf16.mxu0 0
    %1220 = vmatpush1.bf16.msra.mxu0 0
    %1221 = vmatprep.subr.bf16.mxu0 0
    %1222 = vmatpush1.bf16.msra.mxu0 0
    %1223 = vmatprep.subr.bf16.mxu0 0
    %1224 = vmatpush1.bf16.msra.mxu0 0
    %1225 = vmatprep.subr.bf16.mxu0 0
    %1226 = vmatpush1.bf16.msra.mxu0 0
    %1227 = vmatprep.subr.bf16.mxu0 0
    %1228 = vmatpush1.bf16.msra.mxu0 0
    %1229 = vmatprep.subr.bf16.mxu0 0
    %1230 = vmatpush1.bf16.msra.mxu0 0
    %1231 = vmatprep.mubr.bf16.mxu0 0
    %1232 = vmatmul.mubr.bf16.gmra.mrb[0].mxu0 %v1127
    %v1233 = vpop.f32.mrb[0].mxu0
    %v1234 = vadd.f32 %v1149, %v1233
    %v1235 = vpop.f32.mrb[0].mxu0
    %v1236 = vpop.f32.mrb[0].mxu0
    %v1237 = vpop.f32.mrb[0].mxu0
    %1238 = vdwg.mxu0
    %1239 = vst [vmem:[#allocation16] sm:$0x3] %v1234
    // Predicated region
    $region70: #{tpu_custom_call.1} parent=1 // pred_check
      _
    $region71: #{tpu_custom_call.1} parent=1 // pred_check_branch
      %1241 = sbr.rel (0) target = $region73
    $region72: #{tpu_custom_call.1} parent=1 // pred_region
      %s1243 = ssub.s32 256, 256
      %1244 = vsyncadd [#allocation4], %s1243
      %s1245 = sshll.u32 [#allocation13], 4
      %s1246 = int_to_ptr.vmem [resolvable:$true] %s1245
      %1251 = dma.vmem_to_hbm [thread:$0]  %s1246, 256, %s11, [#allocation4], 128, 128, 8
    $region73: #{tpu_custom_call.1} parent=1 // pred_fallthru
      _
    // Predicated region
    $region74: #{tpu_custom_call.1} parent=1 // pred_check
      _
    $region75: #{tpu_custom_call.1} parent=1 // pred_check_branch
      %1253 = sbr.rel (0) target = $region77
    $region76: #{tpu_custom_call.1} parent=1 // pred_region
      %s1255 = ssub.s32 32, 32
      %1256 = vsyncadd [#allocation15], %s1255
      %s1258 = sshll.u32 [#allocation14], 4
      %s1259 = int_to_ptr.vmem [resolvable:$true] %s1258
      %1261 = dma.vmem_to_hbm [thread:$0]  %s1259, 32, %s12, [#allocation15]
    $region77: #{tpu_custom_call.1} parent=1 // pred_fallthru
      _
    // Predicated region
    $region78: #{tpu_custom_call.1} parent=1 // pred_check
      _
    $region79: #{tpu_custom_call.1} parent=1 // pred_check_branch
      %1263 = sbr.rel (0) target = $region81
    $region80: #{tpu_custom_call.1} parent=1 // pred_region
      %s1265 = ssub.s32 32, 32
      %1266 = vsyncadd [#allocation15], %s1265
      %s1268 = sshll.u32 [#allocation16], 4
      %s1269 = int_to_ptr.vmem [resolvable:$true] %s1268
      %1271 = dma.vmem_to_hbm [thread:$0]  %s1269, 32, %s13, [#allocation15]
    $region81: #{tpu_custom_call.1} parent=1 // pred_fallthru
      _
    // Predicated region
    $region82: #{tpu_custom_call.1} parent=1 // pred_check
      _
    $region83: #{tpu_custom_call.1} parent=1 // pred_check_branch
      %1273 = sbr.rel (0) target = $region85
    $region84: #{tpu_custom_call.1} parent=1 // pred_region
      %1274 = dma.done [#allocation4], 256
    $region85: #{tpu_custom_call.1} parent=1 // pred_fallthru
      _
    // Predicated region
    $region86: #{tpu_custom_call.1} parent=1 // pred_check
      _
    $region87: #{tpu_custom_call.1} parent=1 // pred_check_branch
      %1276 = sbr.rel (0) target = $region89
    $region88: #{tpu_custom_call.1} parent=1 // pred_region
      %1277 = dma.done [#allocation15], 32
    $region89: #{tpu_custom_call.1} parent=1 // pred_fallthru
      _
    // Predicated region
    $region90: #{tpu_custom_call.1} parent=1 // pred_check
      _
    $region91: #{tpu_custom_call.1} parent=1 // pred_check_branch
      %1279 = sbr.rel (0) target = $region93
    $region92: #{tpu_custom_call.1} parent=1 // pred_region
      %1280 = dma.done [#allocation15], 32
    $region93: #{tpu_custom_call.1} parent=1 // pred_fallthru
      _
    %1281 = vsyncpa [#allocation3], 1
    %1282 = vsyncpa [#allocation6], 1
    %1283 = vsyncpa [#allocation9], 1
    %1284 = vsyncpa [#allocation12], 1
    %1285 = vsyncpa [#allocation4], 1
    %1286 = vsyncpa [#allocation15], 1

</llo_original>
